<compile_context>
chip_gen: v7x
topology: tpu7x:2x2x1
jax: 0.10.0
libtpu: 0.0.40
codegen_flags: <defaults>
</compile_context>

<pallas_src>
import jax
import jax.numpy as jnp
from jax.experimental import pallas as pl
from jax.experimental.pallas import tpu as pltpu


def _round_up(n, m):
    return (n + m - 1) // m * m


def _pick_time_chunk(T, target):
    """Largest divisor of T that is <= target (so no time padding is needed)."""
    if T <= target:
        return T
    for c in range(target, 0, -1):
        if T % c == 0:
            return c
    return 1


def eeg_bilstm_kernel(x_ref,        # (TC, TB, D)  bf16, time-major chunk
                      wih_f_ref,    # (D, Gp)      bf16, fwd W_ih^T (gates contiguous)
                      whh_f_ref,    # (H, Gp)      bf16, fwd W_hh^T
                      b_f_ref,      # (1, Gp)      f32,  fwd b_ih + b_hh
                      wih_b_ref,    # (D, Gp)      bf16, bwd W_ih^T
                      b_b_ref,      # (1, Gp)      f32,  bwd b_ih + b_hh
                      wp_f_ref,     # (H, Op)      bf16, projection rows, fwd half
                      wp_b_ref,     # (H, Op)      bf16, projection rows, bwd half
                      bp_ref,       # (1, Op)      f32,  projection bias
                      out_ref,      # (TB, Op)     f32
                      gx_ref,       # (TC, TB, Gp) bf16 scratch: x-gates for this chunk
                      h_ref,        # (TB, H)      bf16 scratch: fwd hidden carry
                      c_ref):       # (TB, H)      f32  scratch: fwd cell carry
    TC, TB, D = x_ref.shape
    H, Gp = whh_f_ref.shape
    tc = pl.program_id(1)
    last_tc = pl.num_programs(1) - 1

    # ---- Hoisted input projection: one MXU matmul per time chunk -----------
    # (bias folded in; stored bf16 to halve scratch + vst traffic).
    gx = jnp.dot(x_ref[...].reshape(TC * TB, D), wih_f_ref[...],
                 preferred_element_type=jnp.float32) + b_f_ref[...]
    gx_ref[...] = gx.reshape(TC, TB, Gp).astype(jnp.bfloat16)

    # ---- Reset carried state at the first time chunk of every batch tile ----
    @pl.when(tc == 0)
    def _():
        h_ref[...] = jnp.zeros_like(h_ref)
        c_ref[...] = jnp.zeros_like(c_ref)

    def lstm_update(gates, c):
        # PyTorch gate order i, f, g, o — packed contiguously, H lanes each.
        i = jax.nn.sigmoid(gates[:, 0 * H:1 * H])
        f = jax.nn.sigmoid(gates[:, 1 * H:2 * H])
        g = jnp.tanh(gates[:, 2 * H:3 * H])
        o = jax.nn.sigmoid(gates[:, 3 * H:4 * H])
        c_new = f * c + i * g
        # h returned already in bf16 so the cast is off the h -> W_hh chain.
        return (o * jnp.tanh(c_new)).astype(jnp.bfloat16), c_new

    def body(t, carry):
        h, c = carry
        gates = gx_ref[t].astype(jnp.float32) + jnp.dot(
            h, whh_f_ref[...], preferred_element_type=jnp.float32)
        return lstm_update(gates, c)

    # Bounded unroll: full unroll only for short chunks (long T explodes code
    # size / spills without helping the inherently serial schedule).
    unroll = True if TC <= 16 else 4
    h_fwd, c_fwd = jax.lax.fori_loop(0, TC, body, (h_ref[...], c_ref[...]),
                                     unroll=unroll)
    h_ref[...] = h_fwd
    c_ref[...] = c_fwd

    # ---- Last chunk: backward direction + projection + ReLU ----------------
    @pl.when(tc == last_tc)
    def _():
        # out[:, -1, H:] is ONE reverse step from zero state on x[:, T-1];
        # the zero-state h @ W_hh(reverse) term vanishes, so the reverse W_hh
        # is never needed.  Only valid for the out[:, -1, :] feature.
        gates_b = jnp.dot(x_ref[TC - 1], wih_b_ref[...],
                          preferred_element_type=jnp.float32) + b_b_ref[...]
        h_bwd, _ = lstm_update(gates_b, jnp.zeros((TB, H), jnp.float32))

        # concat([h_f, h_b]) @ Wp == h_f @ Wp[:H] + h_b @ Wp[H:]
        proj = (jnp.dot(h_fwd, wp_f_ref[...], preferred_element_type=jnp.float32)
                + jnp.dot(h_bwd, wp_b_ref[...], preferred_element_type=jnp.float32)
                + bp_ref[...])
        # TODO(synk): Dropout is identity in eval mode, so it is omitted here.
        out_ref[...] = jnp.maximum(proj, 0.0)


def eeg_bilstm_forward(x, params, *, batch_tile=256, time_chunk=32):
    """x: (B, T, D) float32, batch_first.  Returns (B, out_dim) float32.

    batch_tile: 256 fills the 256-wide MXU on v6e/v7x; prefer 128 on v5e.
    time_chunk: timesteps resident per grid step (keeps VMEM independent of T).
    """
    B, T, D = x.shape
    H = params["whh_f"].shape[1]          # weight_hh_l0 is (4H, H)
    O = params["wp"].shape[0]             # Linear weight is (O, 2H)

    LANE, SUB = 128, 16                   # lane tile / bf16 sublane tile
    Gp = _round_up(4 * H, LANE)           # packed gate width (tail-only padding)
    Op = _round_up(O, LANE)               # lane-dense output width

    Bp = _round_up(B, SUB)
    TB = Bp if Bp <= batch_tile else batch_tile
    Bp = _round_up(Bp, TB)

    # TODO(synk): if T has no divisor <= time_chunk (e.g. prime T), this
    # degrades to tiny chunks; a masked tail chunk would be needed to do better.
    TC = _pick_time_chunk(T, time_chunk)
    grid = (Bp // TB, T // TC)

    # Pad batch, cast to bf16, go time-major.
    # TODO(synk): for very large x, fuse this pad+transpose into the kernel DMA
    # (manual make_async_copy) to avoid the extra HBM pass.
    x_p = jnp.pad(x.astype(jnp.bfloat16), ((0, Bp - B), (0, 0), (0, 0)))
    x_tbd = jnp.transpose(x_p, (1, 0, 2))                          # (T, Bp, D)

    pad_g = Gp - 4 * H

    def pack_ih(w):            # (4H, D) -> (D, Gp) bf16, gates contiguous
        return jnp.pad(w.T.astype(jnp.bfloat16), ((0, 0), (0, pad_g)))

    def pack_hh(w):            # (4H, H) -> (H, Gp) bf16
        return jnp.pad(w.T.astype(jnp.bfloat16), ((0, 0), (0, pad_g)))

    def pack_bias(bih, bhh):   # (4H,) -> (1, Gp) f32
        return jnp.pad((bih + bhh).astype(jnp.float32), (0, pad_g)).reshape(1, Gp)

    wih_f = pack_ih(params["wih_f"])
    whh_f = pack_hh(params["whh_f"])
    b_f = pack_bias(params["bih_f"], params["bhh_f"])
    wih_b = pack_ih(params["wih_b"])
    b_b = pack_bias(params["bih_b"], params["bhh_b"])
    # NOTE: reverse-direction W_hh is mathematically unused -> not passed.

    wp = params["wp"]                                              # (O, 2H)
    wp_f = jnp.pad(wp[:, :H].T.astype(jnp.bfloat16), ((0, 0), (0, Op - O)))
    wp_b = jnp.pad(wp[:, H:].T.astype(jnp.bfloat16), ((0, 0), (0, Op - O)))
    bp = jnp.pad(params["bp"].astype(jnp.float32), (0, Op - O)).reshape(1, Op)

    # VMEM budget derived from the actual resident footprint, capped to v7x's
    # 64 MiB physical VMEM (defaults stay far below it).
    weight_bytes = (2 * (wih_f.size + whh_f.size + wih_b.size + wp_f.size
                         + wp_b.size)
                    + 4 * (b_f.size + b_b.size + bp.size))
    vmem_est = (2 * TC * TB * D * 2            # double-buffered x chunk (bf16)
                + TC * TB * Gp * (2 + 4)       # gx scratch (bf16) + f32 matmul temp
                + 2 * TB * Op * 4              # double-buffered out block
                + TB * H * 6                   # h (bf16) + c (f32) carries
                + 2 * weight_bytes)            # double-buffered weights
    vmem_limit = int(min(max(vmem_est * 3 // 2, 16 << 20), 64 << 20))

    out_p = pl.pallas_call(
        eeg_bilstm_kernel,
        out_shape=jax.ShapeDtypeStruct((Bp, Op), jnp.float32),
        grid_spec=pltpu.PrefetchScalarGridSpec(
            num_scalar_prefetch=0,
            grid=grid,
            in_specs=[
                pl.BlockSpec((TC, TB, D), lambda i, t: (t, i, 0)),  # x chunk
                pl.BlockSpec((D, Gp), lambda i, t: (0, 0)),         # W_ih fwd
                pl.BlockSpec((H, Gp), lambda i, t: (0, 0)),         # W_hh fwd
                pl.BlockSpec((1, Gp), lambda i, t: (0, 0)),         # bias fwd
                pl.BlockSpec((D, Gp), lambda i, t: (0, 0)),         # W_ih bwd
                pl.BlockSpec((1, Gp), lambda i, t: (0, 0)),         # bias bwd
                pl.BlockSpec((H, Op), lambda i, t: (0, 0)),         # W_proj fwd half
                pl.BlockSpec((H, Op), lambda i, t: (0, 0)),         # W_proj bwd half
                pl.BlockSpec((1, Op), lambda i, t: (0, 0)),         # proj bias
            ],
            out_specs=pl.BlockSpec((TB, Op), lambda i, t: (i, 0)),
            scratch_shapes=[
                pltpu.VMEM((TC, TB, Gp), jnp.bfloat16),   # gx (x-projection)
                pltpu.VMEM((TB, H), jnp.bfloat16),        # h carry across chunks
                pltpu.VMEM((TB, H), jnp.float32),         # c carry across chunks
            ],
        ),
        compiler_params=pltpu.CompilerParams(
            dimension_semantics=("parallel", "arbitrary"),
            vmem_limit_bytes=vmem_limit,
        ),
    )(x_tbd, wih_f, whh_f, b_f, wih_b, b_b, wp_f, wp_b, bp)

    return out_p[:B, :O]


def init_params(key, input_size, hidden_dim, out_dim):
    """Deterministic init matching PyTorch parameter shapes."""
    k = 1.0 / jnp.sqrt(hidden_dim)
    keys = jax.random.split(key, 10)
    u = lambda kk, shape, bound: jax.random.uniform(
        kk, shape, jnp.float32, minval=-bound, maxval=bound)
    H, D, O = hidden_dim, input_size, out_dim
    return {
        "wih_f": u(keys[0], (4 * H, D), k),
        "whh_f": u(keys[1], (4 * H, H), k),
        "bih_f": u(keys[2], (4 * H,), k),
        "bhh_f": u(keys[3], (4 * H,), k),
        "wih_b": u(keys[4], (4 * H, D), k),
        "whh_b": u(keys[5], (4 * H, H), k),
        "bih_b": u(keys[6], (4 * H,), k),
        "bhh_b": u(keys[7], (4 * H,), k),
        "wp": u(keys[8], (O, 2 * H), 1.0 / jnp.sqrt(2.0 * H)),
        "bp": u(keys[9], (O,), 1.0 / jnp.sqrt(2.0 * H)),
    }


def reference_forward(x, params):
    """Pure-JAX reference for PyTorch BiLSTM + Linear + ReLU (eval mode), using
    bf16 matmul operands / f32 accumulation like the kernel."""
    H = params["whh_f"].shape[1]

    def mm(a, b):
        return jnp.dot(a.astype(jnp.bfloat16), b.astype(jnp.bfloat16),
                       preferred_element_type=jnp.float32)

    def cell(x_t, h, c, wih, whh, b):
        gates = mm(x_t, wih.T) + mm(h, whh.T) + b
        i = jax.nn.sigmoid(gates[:, 0:H])
        f = jax.nn.sigmoid(gates[:, H:2 * H])
        g = jnp.tanh(gates[:, 2 * H:3 * H])
        o = jax.nn.sigmoid(gates[:, 3 * H:4 * H])
        c_new = f * c + i * g
        return o * jnp.tanh(c_new), c_new

    B, T, D = x.shape
    h = jnp.zeros((B, H), jnp.float32)
    c = jnp.zeros((B, H), jnp.float32)
    b_f = params["bih_f"] + params["bhh_f"]
    for t in range(T):
        h, c = cell(x[:, t, :], h, c, params["wih_f"], params["whh_f"], b_f)
    h_fwd = h
    b_b = params["bih_b"] + params["bhh_b"]
    h_bwd, _ = cell(x[:, T - 1, :], jnp.zeros((B, H), jnp.float32),
                    jnp.zeros((B, H), jnp.float32),
                    params["wih_b"], params["whh_b"], b_b)
    feat = jnp.concatenate([h_fwd, h_bwd], axis=-1)
    return jnp.maximum(mm(feat, params["wp"].T) + params["bp"], 0.0)


if __name__ == "__main__":
    # Module defaults (input_size=128, hidden_dim=64, out_dim=64) at small
    # batch / sequence length.
    B, T, D, H, O = 2, 8, 128, 64, 64

    key = jax.random.PRNGKey(0)
    kx, kp = jax.random.split(key)
    x = jax.random.normal(kx, (B, T, D), jnp.float32)
    params = init_params(kp, input_size=D, hidden_dim=H, out_dim=O)

    out = eeg_bilstm_forward(x, params)
    out = jax.block_until_ready(out)

    ref = reference_forward(x, params)
    assert out.shape == (B, O)
    # bf16 matmul operands + bf16 gx staging -> tolerance matched to that path.
    assert jnp.allclose(out, ref, atol=1e-2, rtol=1e-2), "mismatch vs reference"

    print("KERNEL_OK")
</pallas_src>

<mosaic_0001>
module attributes {stable_mosaic.version = 11 : i64} {
  func.func @eeg_bilstm_kernel(%arg0: i32, %arg1: i32, %arg2: memref<8x16x128xbf16, #tpu.memory_space<vmem>>, %arg3: memref<128x256xbf16, #tpu.memory_space<vmem>>, %arg4: memref<64x256xbf16, #tpu.memory_space<vmem>>, %arg5: memref<1x256xf32, #tpu.memory_space<vmem>>, %arg6: memref<128x256xbf16, #tpu.memory_space<vmem>>, %arg7: memref<1x256xf32, #tpu.memory_space<vmem>>, %arg8: memref<64x128xbf16, #tpu.memory_space<vmem>>, %arg9: memref<64x128xbf16, #tpu.memory_space<vmem>>, %arg10: memref<1x128xf32, #tpu.memory_space<vmem>>, %arg11: memref<16x128xf32, #tpu.memory_space<vmem>>, %arg12: memref<8x16x256xbf16, #tpu.memory_space<vmem>>, %arg13: memref<16x64xbf16, #tpu.memory_space<vmem>>, %arg14: memref<16x64xf32, #tpu.memory_space<vmem>>) attributes {dimension_semantics = [#tpu.dimension_semantics<parallel>, #tpu.dimension_semantics<arbitrary>], iteration_bounds = array<i64: 1, 1>, scalar_prefetch = 0 : i64, scratch_operands = 3 : i64, tpu.core_type = #tpu.core_type<tc>, window_params = [{transform_indices = @transform_0, window_bounds = array<i64: 8, 16, 128>}, {pipeline_mode = #tpu.pipeline_mode<synchronous>, transform_indices = @transform_1, window_bounds = array<i64: 128, 256>}, {pipeline_mode = #tpu.pipeline_mode<synchronous>, transform_indices = @transform_2, window_bounds = array<i64: 64, 256>}, {pipeline_mode = #tpu.pipeline_mode<synchronous>, transform_indices = @transform_3, window_bounds = array<i64: 1, 256>}, {pipeline_mode = #tpu.pipeline_mode<synchronous>, transform_indices = @transform_4, window_bounds = array<i64: 128, 256>}, {pipeline_mode = #tpu.pipeline_mode<synchronous>, transform_indices = @transform_5, window_bounds = array<i64: 1, 256>}, {pipeline_mode = #tpu.pipeline_mode<synchronous>, transform_indices = @transform_6, window_bounds = array<i64: 64, 128>}, {pipeline_mode = #tpu.pipeline_mode<synchronous>, transform_indices = @transform_7, window_bounds = array<i64: 64, 128>}, {pipeline_mode = #tpu.pipeline_mode<synchronous>, transform_indices = @transform_8, window_bounds = array<i64: 1, 128>}, {transform_indices = @transform_9, window_bounds = array<i64: 16, 128>}]} {
    %c0 = arith.constant 0 : index
    %c0_0 = arith.constant 0 : index
    %c0_1 = arith.constant 0 : index
    %0 = vector.load %arg2[%c0, %c0_0, %c0_1] : memref<8x16x128xbf16, #tpu.memory_space<vmem>>, vector<8x16x128xbf16>
    %1 = vector.shape_cast %0 : vector<8x16x128xbf16> to vector<128x128xbf16>
    %c0_2 = arith.constant 0 : index
    %c0_3 = arith.constant 0 : index
    %2 = vector.load %arg3[%c0_2, %c0_3] : memref<128x256xbf16, #tpu.memory_space<vmem>>, vector<128x256xbf16>
    %cst = arith.constant dense<0.000000e+00> : vector<128x256xf32>
    %3 = tpu.matmul %1, %2, %cst {dimension_numbers = #tpu.dot_dimension_numbers<[1], [0], [0], [1], [0, 0, 1, 1], [], []>} : vector<128x128xbf16>, vector<128x256xbf16>, vector<128x256xf32> -> vector<128x256xf32>
    %c0_4 = arith.constant 0 : index
    %c0_5 = arith.constant 0 : index
    %4 = vector.load %arg5[%c0_4, %c0_5] : memref<1x256xf32, #tpu.memory_space<vmem>>, vector<1x256xf32>
    %5 = vector.broadcast %4 : vector<1x256xf32> to vector<128x256xf32>
    %6 = arith.addf %3, %5 : vector<128x256xf32>
    %7 = vector.shape_cast %6 : vector<128x256xf32> to vector<8x16x256xf32>
    %8 = arith.truncf %7 : vector<8x16x256xf32> to vector<8x16x256xbf16>
    %c0_6 = arith.constant 0 : index
    %c0_7 = arith.constant 0 : index
    %c0_8 = arith.constant 0 : index
    %9 = vector.load %arg12[%c0_6, %c0_7, %c0_8] : memref<8x16x256xbf16, #tpu.memory_space<vmem>>, vector<8x16x256xbf16>
    tpu.vector_store %arg12[%c0_6, %c0_7, %c0_8], %8 {strides = array<i32>} : memref<8x16x256xbf16, #tpu.memory_space<vmem>>, vector<8x16x256xbf16>,
    %c0_i32 = arith.constant 0 : i32
    %10 = arith.cmpi eq, %arg1, %c0_i32 : i32
    %11 = arith.extui %10 : i1 to i32
    %c0_i32_9 = arith.constant 0 : i32
    %12 = arith.cmpi ne, %11, %c0_i32_9 : i32
    scf.if %12 {
      %cst_85 = arith.constant 0.000000e+00 : bf16
      %284 = vector.broadcast %cst_85 : bf16 to vector<16x64xbf16>
      %c0_86 = arith.constant 0 : index
      %c0_87 = arith.constant 0 : index
      %285 = vector.load %arg13[%c0_86, %c0_87] : memref<16x64xbf16, #tpu.memory_space<vmem>>, vector<16x64xbf16>
      tpu.vector_store %arg13[%c0_86, %c0_87], %284 {strides = array<i32>} : memref<16x64xbf16, #tpu.memory_space<vmem>>, vector<16x64xbf16>,
      %cst_88 = arith.constant 0.000000e+00 : f32
      %286 = vector.broadcast %cst_88 : f32 to vector<16x64xf32>
      %c0_89 = arith.constant 0 : index
      %c0_90 = arith.constant 0 : index
      %287 = vector.load %arg14[%c0_89, %c0_90] : memref<16x64xf32, #tpu.memory_space<vmem>>, vector<16x64xf32>
      tpu.vector_store %arg14[%c0_89, %c0_90], %286 {strides = array<i32>} : memref<16x64xf32, #tpu.memory_space<vmem>>, vector<16x64xf32>,
    } else {
    }
    %c0_10 = arith.constant 0 : index
    %c0_11 = arith.constant 0 : index
    %13 = vector.load %arg13[%c0_10, %c0_11] : memref<16x64xbf16, #tpu.memory_space<vmem>>, vector<16x64xbf16>
    %c0_12 = arith.constant 0 : index
    %c0_13 = arith.constant 0 : index
    %14 = vector.load %arg14[%c0_12, %c0_13] : memref<16x64xf32, #tpu.memory_space<vmem>>, vector<16x64xf32>
    %c0_i32_14 = arith.constant 0 : i32
    %15 = arith.index_cast %c0_i32_14 : i32 to index
    %c0_15 = arith.constant 0 : index
    %c0_16 = arith.constant 0 : index
    %16 = vector.load %arg12[%15, %c0_15, %c0_16] : memref<8x16x256xbf16, #tpu.memory_space<vmem>>, vector<1x16x256xbf16>
    %17 = vector.shape_cast %16 : vector<1x16x256xbf16> to vector<16x256xbf16>
    %18 = arith.extf %17 : vector<16x256xbf16> to vector<16x256xf32>
    %c0_17 = arith.constant 0 : index
    %c0_18 = arith.constant 0 : index
    %19 = vector.load %arg4[%c0_17, %c0_18] : memref<64x256xbf16, #tpu.memory_space<vmem>>, vector<64x256xbf16>
    %cst_19 = arith.constant dense<0.000000e+00> : vector<16x256xf32>
    %20 = tpu.matmul %13, %19, %cst_19 {dimension_numbers = #tpu.dot_dimension_numbers<[1], [0], [0], [1], [0, 0, 1, 1], [], []>} : vector<16x64xbf16>, vector<64x256xbf16>, vector<16x256xf32> -> vector<16x256xf32>
    %21 = arith.addf %18, %20 : vector<16x256xf32>
    %22 = vector.extract_strided_slice %21 {offsets = [0, 0], sizes = [16, 64], strides = [1, 1]} : vector<16x256xf32> to vector<16x64xf32>
    %23 = arith.negf %22 : vector<16x64xf32>
    %24 = math.exp %23 : vector<16x64xf32>
    %cst_20 = arith.constant 1.000000e+00 : f32
    %25 = vector.broadcast %cst_20 : f32 to vector<16x64xf32>
    %26 = arith.addf %25, %24 : vector<16x64xf32>
    %27 = arith.divf %25, %26 : vector<16x64xf32>
    %28 = vector.extract_strided_slice %21 {offsets = [0, 64], sizes = [16, 64], strides = [1, 1]} : vector<16x256xf32> to vector<16x64xf32>
    %29 = arith.negf %28 : vector<16x64xf32>
    %30 = math.exp %29 : vector<16x64xf32>
    %cst_21 = arith.constant 1.000000e+00 : f32
    %31 = vector.broadcast %cst_21 : f32 to vector<16x64xf32>
    %32 = arith.addf %31, %30 : vector<16x64xf32>
    %33 = arith.divf %31, %32 : vector<16x64xf32>
    %34 = vector.extract_strided_slice %21 {offsets = [0, 128], sizes = [16, 64], strides = [1, 1]} : vector<16x256xf32> to vector<16x64xf32>
    %35 = math.tanh %34 : vector<16x64xf32>
    %36 = vector.extract_strided_slice %21 {offsets = [0, 192], sizes = [16, 64], strides = [1, 1]} : vector<16x256xf32> to vector<16x64xf32>
    %37 = arith.negf %36 : vector<16x64xf32>
    %38 = math.exp %37 : vector<16x64xf32>
    %cst_22 = arith.constant 1.000000e+00 : f32
    %39 = vector.broadcast %cst_22 : f32 to vector<16x64xf32>
    %40 = arith.addf %39, %38 : vector<16x64xf32>
    %41 = arith.divf %39, %40 : vector<16x64xf32>
    %42 = arith.mulf %33, %14 : vector<16x64xf32>
    %43 = arith.mulf %27, %35 : vector<16x64xf32>
    %44 = arith.addf %42, %43 : vector<16x64xf32>
    %45 = math.tanh %44 : vector<16x64xf32>
    %46 = arith.mulf %41, %45 : vector<16x64xf32>
    %47 = arith.truncf %46 : vector<16x64xf32> to vector<16x64xbf16>
    %c1_i32 = arith.constant 1 : i32
    %48 = arith.index_cast %c1_i32 : i32 to index
    %c0_23 = arith.constant 0 : index
    %c0_24 = arith.constant 0 : index
    %49 = vector.load %arg12[%48, %c0_23, %c0_24] : memref<8x16x256xbf16, #tpu.memory_space<vmem>>, vector<1x16x256xbf16>
    %50 = vector.shape_cast %49 : vector<1x16x256xbf16> to vector<16x256xbf16>
    %51 = arith.extf %50 : vector<16x256xbf16> to vector<16x256xf32>
    %c0_25 = arith.constant 0 : index
    %c0_26 = arith.constant 0 : index
    %52 = vector.load %arg4[%c0_25, %c0_26] : memref<64x256xbf16, #tpu.memory_space<vmem>>, vector<64x256xbf16>
    %cst_27 = arith.constant dense<0.000000e+00> : vector<16x256xf32>
    %53 = tpu.matmul %47, %52, %cst_27 {dimension_numbers = #tpu.dot_dimension_numbers<[1], [0], [0], [1], [0, 0, 1, 1], [], []>} : vector<16x64xbf16>, vector<64x256xbf16>, vector<16x256xf32> -> vector<16x256xf32>
    %54 = arith.addf %51, %53 : vector<16x256xf32>
    %55 = vector.extract_strided_slice %54 {offsets = [0, 0], sizes = [16, 64], strides = [1, 1]} : vector<16x256xf32> to vector<16x64xf32>
    %56 = arith.negf %55 : vector<16x64xf32>
    %57 = math.exp %56 : vector<16x64xf32>
    %cst_28 = arith.constant 1.000000e+00 : f32
    %58 = vector.broadcast %cst_28 : f32 to vector<16x64xf32>
    %59 = arith.addf %58, %57 : vector<16x64xf32>
    %60 = arith.divf %58, %59 : vector<16x64xf32>
    %61 = vector.extract_strided_slice %54 {offsets = [0, 64], sizes = [16, 64], strides = [1, 1]} : vector<16x256xf32> to vector<16x64xf32>
    %62 = arith.negf %61 : vector<16x64xf32>
    %63 = math.exp %62 : vector<16x64xf32>
    %cst_29 = arith.constant 1.000000e+00 : f32
    %64 = vector.broadcast %cst_29 : f32 to vector<16x64xf32>
    %65 = arith.addf %64, %63 : vector<16x64xf32>
    %66 = arith.divf %64, %65 : vector<16x64xf32>
    %67 = vector.extract_strided_slice %54 {offsets = [0, 128], sizes = [16, 64], strides = [1, 1]} : vector<16x256xf32> to vector<16x64xf32>
    %68 = math.tanh %67 : vector<16x64xf32>
    %69 = vector.extract_strided_slice %54 {offsets = [0, 192], sizes = [16, 64], strides = [1, 1]} : vector<16x256xf32> to vector<16x64xf32>
    %70 = arith.negf %69 : vector<16x64xf32>
    %71 = math.exp %70 : vector<16x64xf32>
    %cst_30 = arith.constant 1.000000e+00 : f32
    %72 = vector.broadcast %cst_30 : f32 to vector<16x64xf32>
    %73 = arith.addf %72, %71 : vector<16x64xf32>
    %74 = arith.divf %72, %73 : vector<16x64xf32>
    %75 = arith.mulf %66, %44 : vector<16x64xf32>
    %76 = arith.mulf %60, %68 : vector<16x64xf32>
    %77 = arith.addf %75, %76 : vector<16x64xf32>
    %78 = math.tanh %77 : vector<16x64xf32>
    %79 = arith.mulf %74, %78 : vector<16x64xf32>
    %80 = arith.truncf %79 : vector<16x64xf32> to vector<16x64xbf16>
    %c2_i32 = arith.constant 2 : i32
    %81 = arith.index_cast %c2_i32 : i32 to index
    %c0_31 = arith.constant 0 : index
    %c0_32 = arith.constant 0 : index
    %82 = vector.load %arg12[%81, %c0_31, %c0_32] : memref<8x16x256xbf16, #tpu.memory_space<vmem>>, vector<1x16x256xbf16>
    %83 = vector.shape_cast %82 : vector<1x16x256xbf16> to vector<16x256xbf16>
    %84 = arith.extf %83 : vector<16x256xbf16> to vector<16x256xf32>
    %c0_33 = arith.constant 0 : index
    %c0_34 = arith.constant 0 : index
    %85 = vector.load %arg4[%c0_33, %c0_34] : memref<64x256xbf16, #tpu.memory_space<vmem>>, vector<64x256xbf16>
    %cst_35 = arith.constant dense<0.000000e+00> : vector<16x256xf32>
    %86 = tpu.matmul %80, %85, %cst_35 {dimension_numbers = #tpu.dot_dimension_numbers<[1], [0], [0], [1], [0, 0, 1, 1], [], []>} : vector<16x64xbf16>, vector<64x256xbf16>, vector<16x256xf32> -> vector<16x256xf32>
    %87 = arith.addf %84, %86 : vector<16x256xf32>
    %88 = vector.extract_strided_slice %87 {offsets = [0, 0], sizes = [16, 64], strides = [1, 1]} : vector<16x256xf32> to vector<16x64xf32>
    %89 = arith.negf %88 : vector<16x64xf32>
    %90 = math.exp %89 : vector<16x64xf32>
    %cst_36 = arith.constant 1.000000e+00 : f32
    %91 = vector.broadcast %cst_36 : f32 to vector<16x64xf32>
    %92 = arith.addf %91, %90 : vector<16x64xf32>
    %93 = arith.divf %91, %92 : vector<16x64xf32>
    %94 = vector.extract_strided_slice %87 {offsets = [0, 64], sizes = [16, 64], strides = [1, 1]} : vector<16x256xf32> to vector<16x64xf32>
    %95 = arith.negf %94 : vector<16x64xf32>
    %96 = math.exp %95 : vector<16x64xf32>
    %cst_37 = arith.constant 1.000000e+00 : f32
    %97 = vector.broadcast %cst_37 : f32 to vector<16x64xf32>
    %98 = arith.addf %97, %96 : vector<16x64xf32>
    %99 = arith.divf %97, %98 : vector<16x64xf32>
    %100 = vector.extract_strided_slice %87 {offsets = [0, 128], sizes = [16, 64], strides = [1, 1]} : vector<16x256xf32> to vector<16x64xf32>
    %101 = math.tanh %100 : vector<16x64xf32>
    %102 = vector.extract_strided_slice %87 {offsets = [0, 192], sizes = [16, 64], strides = [1, 1]} : vector<16x256xf32> to vector<16x64xf32>
    %103 = arith.negf %102 : vector<16x64xf32>
    %104 = math.exp %103 : vector<16x64xf32>
    %cst_38 = arith.constant 1.000000e+00 : f32
    %105 = vector.broadcast %cst_38 : f32 to vector<16x64xf32>
    %106 = arith.addf %105, %104 : vector<16x64xf32>
    %107 = arith.divf %105, %106 : vector<16x64xf32>
    %108 = arith.mulf %99, %77 : vector<16x64xf32>
    %109 = arith.mulf %93, %101 : vector<16x64xf32>
    %110 = arith.addf %108, %109 : vector<16x64xf32>
    %111 = math.tanh %110 : vector<16x64xf32>
    %112 = arith.mulf %107, %111 : vector<16x64xf32>
    %113 = arith.truncf %112 : vector<16x64xf32> to vector<16x64xbf16>
    %c3_i32 = arith.constant 3 : i32
    %114 = arith.index_cast %c3_i32 : i32 to index
    %c0_39 = arith.constant 0 : index
    %c0_40 = arith.constant 0 : index
    %115 = vector.load %arg12[%114, %c0_39, %c0_40] : memref<8x16x256xbf16, #tpu.memory_space<vmem>>, vector<1x16x256xbf16>
    %116 = vector.shape_cast %115 : vector<1x16x256xbf16> to vector<16x256xbf16>
    %117 = arith.extf %116 : vector<16x256xbf16> to vector<16x256xf32>
    %c0_41 = arith.constant 0 : index
    %c0_42 = arith.constant 0 : index
    %118 = vector.load %arg4[%c0_41, %c0_42] : memref<64x256xbf16, #tpu.memory_space<vmem>>, vector<64x256xbf16>
    %cst_43 = arith.constant dense<0.000000e+00> : vector<16x256xf32>
    %119 = tpu.matmul %113, %118, %cst_43 {dimension_numbers = #tpu.dot_dimension_numbers<[1], [0], [0], [1], [0, 0, 1, 1], [], []>} : vector<16x64xbf16>, vector<64x256xbf16>, vector<16x256xf32> -> vector<16x256xf32>
    %120 = arith.addf %117, %119 : vector<16x256xf32>
    %121 = vector.extract_strided_slice %120 {offsets = [0, 0], sizes = [16, 64], strides = [1, 1]} : vector<16x256xf32> to vector<16x64xf32>
    %122 = arith.negf %121 : vector<16x64xf32>
    %123 = math.exp %122 : vector<16x64xf32>
    %cst_44 = arith.constant 1.000000e+00 : f32
    %124 = vector.broadcast %cst_44 : f32 to vector<16x64xf32>
    %125 = arith.addf %124, %123 : vector<16x64xf32>
    %126 = arith.divf %124, %125 : vector<16x64xf32>
    %127 = vector.extract_strided_slice %120 {offsets = [0, 64], sizes = [16, 64], strides = [1, 1]} : vector<16x256xf32> to vector<16x64xf32>
    %128 = arith.negf %127 : vector<16x64xf32>
    %129 = math.exp %128 : vector<16x64xf32>
    %cst_45 = arith.constant 1.000000e+00 : f32
    %130 = vector.broadcast %cst_45 : f32 to vector<16x64xf32>
    %131 = arith.addf %130, %129 : vector<16x64xf32>
    %132 = arith.divf %130, %131 : vector<16x64xf32>
    %133 = vector.extract_strided_slice %120 {offsets = [0, 128], sizes = [16, 64], strides = [1, 1]} : vector<16x256xf32> to vector<16x64xf32>
    %134 = math.tanh %133 : vector<16x64xf32>
    %135 = vector.extract_strided_slice %120 {offsets = [0, 192], sizes = [16, 64], strides = [1, 1]} : vector<16x256xf32> to vector<16x64xf32>
    %136 = arith.negf %135 : vector<16x64xf32>
    %137 = math.exp %136 : vector<16x64xf32>
    %cst_46 = arith.constant 1.000000e+00 : f32
    %138 = vector.broadcast %cst_46 : f32 to vector<16x64xf32>
    %139 = arith.addf %138, %137 : vector<16x64xf32>
    %140 = arith.divf %138, %139 : vector<16x64xf32>
    %141 = arith.mulf %132, %110 : vector<16x64xf32>
    %142 = arith.mulf %126, %134 : vector<16x64xf32>
    %143 = arith.addf %141, %142 : vector<16x64xf32>
    %144 = math.tanh %143 : vector<16x64xf32>
    %145 = arith.mulf %140, %144 : vector<16x64xf32>
    %146 = arith.truncf %145 : vector<16x64xf32> to vector<16x64xbf16>
    %c4_i32 = arith.constant 4 : i32
    %147 = arith.index_cast %c4_i32 : i32 to index
    %c0_47 = arith.constant 0 : index
    %c0_48 = arith.constant 0 : index
    %148 = vector.load %arg12[%147, %c0_47, %c0_48] : memref<8x16x256xbf16, #tpu.memory_space<vmem>>, vector<1x16x256xbf16>
    %149 = vector.shape_cast %148 : vector<1x16x256xbf16> to vector<16x256xbf16>
    %150 = arith.extf %149 : vector<16x256xbf16> to vector<16x256xf32>
    %c0_49 = arith.constant 0 : index
    %c0_50 = arith.constant 0 : index
    %151 = vector.load %arg4[%c0_49, %c0_50] : memref<64x256xbf16, #tpu.memory_space<vmem>>, vector<64x256xbf16>
    %cst_51 = arith.constant dense<0.000000e+00> : vector<16x256xf32>
    %152 = tpu.matmul %146, %151, %cst_51 {dimension_numbers = #tpu.dot_dimension_numbers<[1], [0], [0], [1], [0, 0, 1, 1], [], []>} : vector<16x64xbf16>, vector<64x256xbf16>, vector<16x256xf32> -> vector<16x256xf32>
    %153 = arith.addf %150, %152 : vector<16x256xf32>
    %154 = vector.extract_strided_slice %153 {offsets = [0, 0], sizes = [16, 64], strides = [1, 1]} : vector<16x256xf32> to vector<16x64xf32>
    %155 = arith.negf %154 : vector<16x64xf32>
    %156 = math.exp %155 : vector<16x64xf32>
    %cst_52 = arith.constant 1.000000e+00 : f32
    %157 = vector.broadcast %cst_52 : f32 to vector<16x64xf32>
    %158 = arith.addf %157, %156 : vector<16x64xf32>
    %159 = arith.divf %157, %158 : vector<16x64xf32>
    %160 = vector.extract_strided_slice %153 {offsets = [0, 64], sizes = [16, 64], strides = [1, 1]} : vector<16x256xf32> to vector<16x64xf32>
    %161 = arith.negf %160 : vector<16x64xf32>
    %162 = math.exp %161 : vector<16x64xf32>
    %cst_53 = arith.constant 1.000000e+00 : f32
    %163 = vector.broadcast %cst_53 : f32 to vector<16x64xf32>
    %164 = arith.addf %163, %162 : vector<16x64xf32>
    %165 = arith.divf %163, %164 : vector<16x64xf32>
    %166 = vector.extract_strided_slice %153 {offsets = [0, 128], sizes = [16, 64], strides = [1, 1]} : vector<16x256xf32> to vector<16x64xf32>
    %167 = math.tanh %166 : vector<16x64xf32>
    %168 = vector.extract_strided_slice %153 {offsets = [0, 192], sizes = [16, 64], strides = [1, 1]} : vector<16x256xf32> to vector<16x64xf32>
    %169 = arith.negf %168 : vector<16x64xf32>
    %170 = math.exp %169 : vector<16x64xf32>
    %cst_54 = arith.constant 1.000000e+00 : f32
    %171 = vector.broadcast %cst_54 : f32 to vector<16x64xf32>
    %172 = arith.addf %171, %170 : vector<16x64xf32>
    %173 = arith.divf %171, %172 : vector<16x64xf32>
    %174 = arith.mulf %165, %143 : vector<16x64xf32>
    %175 = arith.mulf %159, %167 : vector<16x64xf32>
    %176 = arith.addf %174, %175 : vector<16x64xf32>
    %177 = math.tanh %176 : vector<16x64xf32>
    %178 = arith.mulf %173, %177 : vector<16x64xf32>
    %179 = arith.truncf %178 : vector<16x64xf32> to vector<16x64xbf16>
    %c5_i32 = arith.constant 5 : i32
    %180 = arith.index_cast %c5_i32 : i32 to index
    %c0_55 = arith.constant 0 : index
    %c0_56 = arith.constant 0 : index
    %181 = vector.load %arg12[%180, %c0_55, %c0_56] : memref<8x16x256xbf16, #tpu.memory_space<vmem>>, vector<1x16x256xbf16>
    %182 = vector.shape_cast %181 : vector<1x16x256xbf16> to vector<16x256xbf16>
    %183 = arith.extf %182 : vector<16x256xbf16> to vector<16x256xf32>
    %c0_57 = arith.constant 0 : index
    %c0_58 = arith.constant 0 : index
    %184 = vector.load %arg4[%c0_57, %c0_58] : memref<64x256xbf16, #tpu.memory_space<vmem>>, vector<64x256xbf16>
    %cst_59 = arith.constant dense<0.000000e+00> : vector<16x256xf32>
    %185 = tpu.matmul %179, %184, %cst_59 {dimension_numbers = #tpu.dot_dimension_numbers<[1], [0], [0], [1], [0, 0, 1, 1], [], []>} : vector<16x64xbf16>, vector<64x256xbf16>, vector<16x256xf32> -> vector<16x256xf32>
    %186 = arith.addf %183, %185 : vector<16x256xf32>
    %187 = vector.extract_strided_slice %186 {offsets = [0, 0], sizes = [16, 64], strides = [1, 1]} : vector<16x256xf32> to vector<16x64xf32>
    %188 = arith.negf %187 : vector<16x64xf32>
    %189 = math.exp %188 : vector<16x64xf32>
    %cst_60 = arith.constant 1.000000e+00 : f32
    %190 = vector.broadcast %cst_60 : f32 to vector<16x64xf32>
    %191 = arith.addf %190, %189 : vector<16x64xf32>
    %192 = arith.divf %190, %191 : vector<16x64xf32>
    %193 = vector.extract_strided_slice %186 {offsets = [0, 64], sizes = [16, 64], strides = [1, 1]} : vector<16x256xf32> to vector<16x64xf32>
    %194 = arith.negf %193 : vector<16x64xf32>
    %195 = math.exp %194 : vector<16x64xf32>
    %cst_61 = arith.constant 1.000000e+00 : f32
    %196 = vector.broadcast %cst_61 : f32 to vector<16x64xf32>
    %197 = arith.addf %196, %195 : vector<16x64xf32>
    %198 = arith.divf %196, %197 : vector<16x64xf32>
    %199 = vector.extract_strided_slice %186 {offsets = [0, 128], sizes = [16, 64], strides = [1, 1]} : vector<16x256xf32> to vector<16x64xf32>
    %200 = math.tanh %199 : vector<16x64xf32>
    %201 = vector.extract_strided_slice %186 {offsets = [0, 192], sizes = [16, 64], strides = [1, 1]} : vector<16x256xf32> to vector<16x64xf32>
    %202 = arith.negf %201 : vector<16x64xf32>
    %203 = math.exp %202 : vector<16x64xf32>
    %cst_62 = arith.constant 1.000000e+00 : f32
    %204 = vector.broadcast %cst_62 : f32 to vector<16x64xf32>
    %205 = arith.addf %204, %203 : vector<16x64xf32>
    %206 = arith.divf %204, %205 : vector<16x64xf32>
    %207 = arith.mulf %198, %176 : vector<16x64xf32>
    %208 = arith.mulf %192, %200 : vector<16x64xf32>
    %209 = arith.addf %207, %208 : vector<16x64xf32>
    %210 = math.tanh %209 : vector<16x64xf32>
    %211 = arith.mulf %206, %210 : vector<16x64xf32>
    %212 = arith.truncf %211 : vector<16x64xf32> to vector<16x64xbf16>
    %c6_i32 = arith.constant 6 : i32
    %213 = arith.index_cast %c6_i32 : i32 to index
    %c0_63 = arith.constant 0 : index
    %c0_64 = arith.constant 0 : index
    %214 = vector.load %arg12[%213, %c0_63, %c0_64] : memref<8x16x256xbf16, #tpu.memory_space<vmem>>, vector<1x16x256xbf16>
    %215 = vector.shape_cast %214 : vector<1x16x256xbf16> to vector<16x256xbf16>
    %216 = arith.extf %215 : vector<16x256xbf16> to vector<16x256xf32>
    %c0_65 = arith.constant 0 : index
    %c0_66 = arith.constant 0 : index
    %217 = vector.load %arg4[%c0_65, %c0_66] : memref<64x256xbf16, #tpu.memory_space<vmem>>, vector<64x256xbf16>
    %cst_67 = arith.constant dense<0.000000e+00> : vector<16x256xf32>
    %218 = tpu.matmul %212, %217, %cst_67 {dimension_numbers = #tpu.dot_dimension_numbers<[1], [0], [0], [1], [0, 0, 1, 1], [], []>} : vector<16x64xbf16>, vector<64x256xbf16>, vector<16x256xf32> -> vector<16x256xf32>
    %219 = arith.addf %216, %218 : vector<16x256xf32>
    %220 = vector.extract_strided_slice %219 {offsets = [0, 0], sizes = [16, 64], strides = [1, 1]} : vector<16x256xf32> to vector<16x64xf32>
    %221 = arith.negf %220 : vector<16x64xf32>
    %222 = math.exp %221 : vector<16x64xf32>
    %cst_68 = arith.constant 1.000000e+00 : f32
    %223 = vector.broadcast %cst_68 : f32 to vector<16x64xf32>
    %224 = arith.addf %223, %222 : vector<16x64xf32>
    %225 = arith.divf %223, %224 : vector<16x64xf32>
    %226 = vector.extract_strided_slice %219 {offsets = [0, 64], sizes = [16, 64], strides = [1, 1]} : vector<16x256xf32> to vector<16x64xf32>
    %227 = arith.negf %226 : vector<16x64xf32>
    %228 = math.exp %227 : vector<16x64xf32>
    %cst_69 = arith.constant 1.000000e+00 : f32
    %229 = vector.broadcast %cst_69 : f32 to vector<16x64xf32>
    %230 = arith.addf %229, %228 : vector<16x64xf32>
    %231 = arith.divf %229, %230 : vector<16x64xf32>
    %232 = vector.extract_strided_slice %219 {offsets = [0, 128], sizes = [16, 64], strides = [1, 1]} : vector<16x256xf32> to vector<16x64xf32>
    %233 = math.tanh %232 : vector<16x64xf32>
    %234 = vector.extract_strided_slice %219 {offsets = [0, 192], sizes = [16, 64], strides = [1, 1]} : vector<16x256xf32> to vector<16x64xf32>
    %235 = arith.negf %234 : vector<16x64xf32>
    %236 = math.exp %235 : vector<16x64xf32>
    %cst_70 = arith.constant 1.000000e+00 : f32
    %237 = vector.broadcast %cst_70 : f32 to vector<16x64xf32>
    %238 = arith.addf %237, %236 : vector<16x64xf32>
    %239 = arith.divf %237, %238 : vector<16x64xf32>
    %240 = arith.mulf %231, %209 : vector<16x64xf32>
    %241 = arith.mulf %225, %233 : vector<16x64xf32>
    %242 = arith.addf %240, %241 : vector<16x64xf32>
    %243 = math.tanh %242 : vector<16x64xf32>
    %244 = arith.mulf %239, %243 : vector<16x64xf32>
    %245 = arith.truncf %244 : vector<16x64xf32> to vector<16x64xbf16>
    %c7_i32 = arith.constant 7 : i32
    %246 = arith.index_cast %c7_i32 : i32 to index
    %c0_71 = arith.constant 0 : index
    %c0_72 = arith.constant 0 : index
    %247 = vector.load %arg12[%246, %c0_71, %c0_72] : memref<8x16x256xbf16, #tpu.memory_space<vmem>>, vector<1x16x256xbf16>
    %248 = vector.shape_cast %247 : vector<1x16x256xbf16> to vector<16x256xbf16>
    %249 = arith.extf %248 : vector<16x256xbf16> to vector<16x256xf32>
    %c0_73 = arith.constant 0 : index
    %c0_74 = arith.constant 0 : index
    %250 = vector.load %arg4[%c0_73, %c0_74] : memref<64x256xbf16, #tpu.memory_space<vmem>>, vector<64x256xbf16>
    %cst_75 = arith.constant dense<0.000000e+00> : vector<16x256xf32>
    %251 = tpu.matmul %245, %250, %cst_75 {dimension_numbers = #tpu.dot_dimension_numbers<[1], [0], [0], [1], [0, 0, 1, 1], [], []>} : vector<16x64xbf16>, vector<64x256xbf16>, vector<16x256xf32> -> vector<16x256xf32>
    %252 = arith.addf %249, %251 : vector<16x256xf32>
    %253 = vector.extract_strided_slice %252 {offsets = [0, 0], sizes = [16, 64], strides = [1, 1]} : vector<16x256xf32> to vector<16x64xf32>
    %254 = arith.negf %253 : vector<16x64xf32>
    %255 = math.exp %254 : vector<16x64xf32>
    %cst_76 = arith.constant 1.000000e+00 : f32
    %256 = vector.broadcast %cst_76 : f32 to vector<16x64xf32>
    %257 = arith.addf %256, %255 : vector<16x64xf32>
    %258 = arith.divf %256, %257 : vector<16x64xf32>
    %259 = vector.extract_strided_slice %252 {offsets = [0, 64], sizes = [16, 64], strides = [1, 1]} : vector<16x256xf32> to vector<16x64xf32>
    %260 = arith.negf %259 : vector<16x64xf32>
    %261 = math.exp %260 : vector<16x64xf32>
    %cst_77 = arith.constant 1.000000e+00 : f32
    %262 = vector.broadcast %cst_77 : f32 to vector<16x64xf32>
    %263 = arith.addf %262, %261 : vector<16x64xf32>
    %264 = arith.divf %262, %263 : vector<16x64xf32>
    %265 = vector.extract_strided_slice %252 {offsets = [0, 128], sizes = [16, 64], strides = [1, 1]} : vector<16x256xf32> to vector<16x64xf32>
    %266 = math.tanh %265 : vector<16x64xf32>
    %267 = vector.extract_strided_slice %252 {offsets = [0, 192], sizes = [16, 64], strides = [1, 1]} : vector<16x256xf32> to vector<16x64xf32>
    %268 = arith.negf %267 : vector<16x64xf32>
    %269 = math.exp %268 : vector<16x64xf32>
    %cst_78 = arith.constant 1.000000e+00 : f32
    %270 = vector.broadcast %cst_78 : f32 to vector<16x64xf32>
    %271 = arith.addf %270, %269 : vector<16x64xf32>
    %272 = arith.divf %270, %271 : vector<16x64xf32>
    %273 = arith.mulf %264, %242 : vector<16x64xf32>
    %274 = arith.mulf %258, %266 : vector<16x64xf32>
    %275 = arith.addf %273, %274 : vector<16x64xf32>
    %276 = math.tanh %275 : vector<16x64xf32>
    %277 = arith.mulf %272, %276 : vector<16x64xf32>
    %278 = arith.truncf %277 : vector<16x64xf32> to vector<16x64xbf16>
    %c8_i32 = arith.constant 8 : i32
    %c0_79 = arith.constant 0 : index
    %c0_80 = arith.constant 0 : index
    %279 = vector.load %arg13[%c0_79, %c0_80] : memref<16x64xbf16, #tpu.memory_space<vmem>>, vector<16x64xbf16>
    tpu.vector_store %arg13[%c0_79, %c0_80], %278 {strides = array<i32>} : memref<16x64xbf16, #tpu.memory_space<vmem>>, vector<16x64xbf16>,
    %c0_81 = arith.constant 0 : index
    %c0_82 = arith.constant 0 : index
    %280 = vector.load %arg14[%c0_81, %c0_82] : memref<16x64xf32, #tpu.memory_space<vmem>>, vector<16x64xf32>
    tpu.vector_store %arg14[%c0_81, %c0_82], %275 {strides = array<i32>} : memref<16x64xf32, #tpu.memory_space<vmem>>, vector<16x64xf32>,
    %c0_i32_83 = arith.constant 0 : i32
    %281 = arith.cmpi eq, %arg1, %c0_i32_83 : i32
    %282 = arith.extui %281 : i1 to i32
    %c0_i32_84 = arith.constant 0 : i32
    %283 = arith.cmpi ne, %282, %c0_i32_84 : i32
    scf.if %283 {
      %c7 = arith.constant 7 : index
      %c0_85 = arith.constant 0 : index
      %c0_86 = arith.constant 0 : index
      %284 = vector.load %arg2[%c7, %c0_85, %c0_86] : memref<8x16x128xbf16, #tpu.memory_space<vmem>>, vector<1x16x128xbf16>
      %285 = vector.shape_cast %284 : vector<1x16x128xbf16> to vector<16x128xbf16>
      %c0_87 = arith.constant 0 : index
      %c0_88 = arith.constant 0 : index
      %286 = vector.load %arg6[%c0_87, %c0_88] : memref<128x256xbf16, #tpu.memory_space<vmem>>, vector<128x256xbf16>
      %cst_89 = arith.constant dense<0.000000e+00> : vector<16x256xf32>
      %287 = tpu.matmul %285, %286, %cst_89 {dimension_numbers = #tpu.dot_dimension_numbers<[1], [0], [0], [1], [0, 0, 1, 1], [], []>} : vector<16x128xbf16>, vector<128x256xbf16>, vector<16x256xf32> -> vector<16x256xf32>
      %c0_90 = arith.constant 0 : index
      %c0_91 = arith.constant 0 : index
      %288 = vector.load %arg7[%c0_90, %c0_91] : memref<1x256xf32, #tpu.memory_space<vmem>>, vector<1x256xf32>
      %289 = vector.broadcast %288 : vector<1x256xf32> to vector<16x256xf32>
      %290 = arith.addf %287, %289 : vector<16x256xf32>
      %cst_92 = arith.constant 0.000000e+00 : f32
      %291 = vector.broadcast %cst_92 : f32 to vector<16x64xf32>
      %292 = vector.extract_strided_slice %290 {offsets = [0, 0], sizes = [16, 64], strides = [1, 1]} : vector<16x256xf32> to vector<16x64xf32>
      %293 = arith.negf %292 : vector<16x64xf32>
      %294 = math.exp %293 : vector<16x64xf32>
      %cst_93 = arith.constant 1.000000e+00 : f32
      %295 = vector.broadcast %cst_93 : f32 to vector<16x64xf32>
      %296 = arith.addf %295, %294 : vector<16x64xf32>
      %297 = arith.divf %295, %296 : vector<16x64xf32>
      %298 = vector.extract_strided_slice %290 {offsets = [0, 64], sizes = [16, 64], strides = [1, 1]} : vector<16x256xf32> to vector<16x64xf32>
      %299 = arith.negf %298 : vector<16x64xf32>
      %300 = math.exp %299 : vector<16x64xf32>
      %cst_94 = arith.constant 1.000000e+00 : f32
      %301 = vector.broadcast %cst_94 : f32 to vector<16x64xf32>
      %302 = arith.addf %301, %300 : vector<16x64xf32>
      %303 = arith.divf %301, %302 : vector<16x64xf32>
      %304 = vector.extract_strided_slice %290 {offsets = [0, 128], sizes = [16, 64], strides = [1, 1]} : vector<16x256xf32> to vector<16x64xf32>
      %305 = math.tanh %304 : vector<16x64xf32>
      %306 = vector.extract_strided_slice %290 {offsets = [0, 192], sizes = [16, 64], strides = [1, 1]} : vector<16x256xf32> to vector<16x64xf32>
      %307 = arith.negf %306 : vector<16x64xf32>
      %308 = math.exp %307 : vector<16x64xf32>
      %cst_95 = arith.constant 1.000000e+00 : f32
      %309 = vector.broadcast %cst_95 : f32 to vector<16x64xf32>
      %310 = arith.addf %309, %308 : vector<16x64xf32>
      %311 = arith.divf %309, %310 : vector<16x64xf32>
      %312 = arith.mulf %303, %291 : vector<16x64xf32>
      %313 = arith.mulf %297, %305 : vector<16x64xf32>
      %314 = arith.addf %312, %313 : vector<16x64xf32>
      %315 = math.tanh %314 : vector<16x64xf32>
      %316 = arith.mulf %311, %315 : vector<16x64xf32>
      %317 = arith.truncf %316 : vector<16x64xf32> to vector<16x64xbf16>
      %c0_96 = arith.constant 0 : index
      %c0_97 = arith.constant 0 : index
      %318 = vector.load %arg8[%c0_96, %c0_97] : memref<64x128xbf16, #tpu.memory_space<vmem>>, vector<64x128xbf16>
      %cst_98 = arith.constant dense<0.000000e+00> : vector<16x128xf32>
      %319 = tpu.matmul %278, %318, %cst_98 {dimension_numbers = #tpu.dot_dimension_numbers<[1], [0], [0], [1], [0, 0, 1, 1], [], []>} : vector<16x64xbf16>, vector<64x128xbf16>, vector<16x128xf32> -> vector<16x128xf32>
      %c0_99 = arith.constant 0 : index
      %c0_100 = arith.constant 0 : index
      %320 = vector.load %arg9[%c0_99, %c0_100] : memref<64x128xbf16, #tpu.memory_space<vmem>>, vector<64x128xbf16>
      %cst_101 = arith.constant dense<0.000000e+00> : vector<16x128xf32>
      %321 = tpu.matmul %317, %320, %cst_101 {dimension_numbers = #tpu.dot_dimension_numbers<[1], [0], [0], [1], [0, 0, 1, 1], [], []>} : vector<16x64xbf16>, vector<64x128xbf16>, vector<16x128xf32> -> vector<16x128xf32>
      %322 = arith.addf %319, %321 : vector<16x128xf32>
      %c0_102 = arith.constant 0 : index
      %c0_103 = arith.constant 0 : index
      %323 = vector.load %arg10[%c0_102, %c0_103] : memref<1x128xf32, #tpu.memory_space<vmem>>, vector<1x128xf32>
      %324 = vector.broadcast %323 : vector<1x128xf32> to vector<16x128xf32>
      %325 = arith.addf %322, %324 : vector<16x128xf32>
      %cst_104 = arith.constant 0.000000e+00 : f32
      %326 = vector.broadcast %cst_104 : f32 to vector<16x128xf32>
      %327 = arith.maximumf %325, %326 : vector<16x128xf32>
      %c0_105 = arith.constant 0 : index
      %c0_106 = arith.constant 0 : index
      %328 = vector.load %arg11[%c0_105, %c0_106] : memref<16x128xf32, #tpu.memory_space<vmem>>, vector<16x128xf32>
      tpu.vector_store %arg11[%c0_105, %c0_106], %327 {strides = array<i32>} : memref<16x128xf32, #tpu.memory_space<vmem>>, vector<16x128xf32>,
    } else {
    }
    return
  }
  func.func @transform_0(%arg0: i32, %arg1: i32) -> (i32, i32, i32) {
    %c0_i32 = arith.constant 0 : i32
    %c0_i32_0 = arith.constant 0 : i32
    return %arg1, %arg0, %c0_i32 : i32, i32, i32
  }
  func.func @transform_1(%arg0: i32, %arg1: i32) -> (i32, i32) {
    %c0_i32 = arith.constant 0 : i32
    %c0_i32_0 = arith.constant 0 : i32
    %c0_i32_1 = arith.constant 0 : i32
    return %c0_i32, %c0_i32_0 : i32, i32
  }
  func.func @transform_2(%arg0: i32, %arg1: i32) -> (i32, i32) {
    %c0_i32 = arith.constant 0 : i32
    %c0_i32_0 = arith.constant 0 : i32
    %c0_i32_1 = arith.constant 0 : i32
    return %c0_i32, %c0_i32_0 : i32, i32
  }
  func.func @transform_3(%arg0: i32, %arg1: i32) -> (i32, i32) {
    %c0_i32 = arith.constant 0 : i32
    %c0_i32_0 = arith.constant 0 : i32
    %c0_i32_1 = arith.constant 0 : i32
    return %c0_i32, %c0_i32_0 : i32, i32
  }
  func.func @transform_4(%arg0: i32, %arg1: i32) -> (i32, i32) {
    %c0_i32 = arith.constant 0 : i32
    %c0_i32_0 = arith.constant 0 : i32
    %c0_i32_1 = arith.constant 0 : i32
    return %c0_i32, %c0_i32_0 : i32, i32
  }
  func.func @transform_5(%arg0: i32, %arg1: i32) -> (i32, i32) {
    %c0_i32 = arith.constant 0 : i32
    %c0_i32_0 = arith.constant 0 : i32
    %c0_i32_1 = arith.constant 0 : i32
    return %c0_i32, %c0_i32_0 : i32, i32
  }
  func.func @transform_6(%arg0: i32, %arg1: i32) -> (i32, i32) {
    %c0_i32 = arith.constant 0 : i32
    %c0_i32_0 = arith.constant 0 : i32
    %c0_i32_1 = arith.constant 0 : i32
    return %c0_i32, %c0_i32_0 : i32, i32
  }
  func.func @transform_7(%arg0: i32, %arg1: i32) -> (i32, i32) {
    %c0_i32 = arith.constant 0 : i32
    %c0_i32_0 = arith.constant 0 : i32
    %c0_i32_1 = arith.constant 0 : i32
    return %c0_i32, %c0_i32_0 : i32, i32
  }
  func.func @transform_8(%arg0: i32, %arg1: i32) -> (i32, i32) {
    %c0_i32 = arith.constant 0 : i32
    %c0_i32_0 = arith.constant 0 : i32
    %c0_i32_1 = arith.constant 0 : i32
    return %c0_i32, %c0_i32_0 : i32, i32
  }
  func.func @transform_9(%arg0: i32, %arg1: i32) -> (i32, i32) {
    %c0_i32 = arith.constant 0 : i32
    %c0_i32_0 = arith.constant 0 : i32
    return %arg0, %c0_i32 : i32, i32
  }
}

</mosaic_0001>

<llo_original>
// kernel: tpu_custom_call.1
$region0: #{tpu_custom_call.1}
  #allocation0 [shape = 'u32[]', space=smem, size = 0x4, offset = 0x4, fixed_abs, tag = 'smem constant byte address 0x4 - core index']
  #allocation1 [shape = 'u32[144,128]{1,0:T(1,128)}', space=vmem, size = 0x12000, scoped, tag = 'internal scratch']
  #allocation2 [shape = 'bf16[8,16,256]{2,1,0:T(16,128)(2,1)}', space=vmem, size = 0x10000, scoped, tag = 'scratch operand']
  #allocation3 [shape = 'bf16[16,64]{1,0:T(16,128)(2,1)}', space=vmem, size = 0x1000, scoped, tag = 'scratch operand']
  #allocation4 [shape = 'f32[16,64]{1,0:T(8,128)}', space=vmem, size = 0x2000, scoped, tag = 'scratch operand']
  %s0 = inlined_call_operand.hbm [shape: bf16[8,16,128], index: 0, kind: input, shape index: {}]
  %s1 = inlined_call_operand.hbm [shape: bf16[128,256], index: 1, kind: input, shape index: {}]
  %s2 = inlined_call_operand.hbm [shape: bf16[64,256], index: 2, kind: input, shape index: {}]
  %s3 = inlined_call_operand.vmem [shape: f32[1,256], index: 3, kind: input, shape index: {}]
  %s4 = inlined_call_operand.hbm [shape: bf16[128,256], index: 4, kind: input, shape index: {}]
  %s5 = inlined_call_operand.vmem [shape: f32[1,256], index: 5, kind: input, shape index: {}]
  %s6 = inlined_call_operand.hbm [shape: bf16[64,128], index: 6, kind: input, shape index: {}]
  %s7 = inlined_call_operand.hbm [shape: bf16[64,128], index: 7, kind: input, shape index: {}]
  %s8 = inlined_call_operand.vmem [shape: f32[1,128], index: 8, kind: input, shape index: {}]
  %s9 = inlined_call_operand.hbm [shape: f32[16,128], index: 9, kind: output, shape index: {}]
  %s10 = sld [smem:[#allocation0]]
  $region78: #{tpu_custom_call.1} parent=0
    _
  %s12 = ssub.s32 1, %s10
  %s13 = scalar_select 0, %s12, %s10
  $region1: #{tpu_custom_call.1} parent=0
    #allocation5 [shape = 'u8[32768]{0}', space=vmem, size = 0x8000, scoped, tag = 'input window, operand 0, single buffered']
    #allocation6 [shape = 's32[1]{0}', space=sflag, size = 0x4, scoped, tag = 'scoped memory for tpu_custom_call.1']
    #allocation7 [shape = 's32[1]{0}', space=sflag, size = 0x4, scoped, tag = 'scoped memory for tpu_custom_call.1']
    #allocation8 [shape = 'u8[65536]{0}', space=vmem, size = 0x10000, scoped, tag = 'input window, operand 1, single buffered']
    #allocation9 [shape = 's32[1]{0}', space=sflag, size = 0x4, scoped, tag = 'scoped memory for tpu_custom_call.1']
    #allocation10 [shape = 'u8[32768]{0}', space=vmem, size = 0x8000, scoped, tag = 'input window, operand 2, single buffered']
    #allocation11 [shape = 'u8[65536]{0}', space=vmem, size = 0x10000, scoped, tag = 'input window, operand 4, single buffered']
    #allocation12 [shape = 's32[1]{0}', space=sflag, size = 0x4, scoped, tag = 'scoped memory for tpu_custom_call.1']
    #allocation13 [shape = 'u8[16384]{0}', space=vmem, size = 0x4000, scoped, tag = 'input window, operand 6, single buffered']
    #allocation14 [shape = 'u8[16384]{0}', space=vmem, size = 0x4000, scoped, tag = 'input window, operand 7, single buffered']
    #allocation15 [shape = 's32[1]{0}', space=sflag, size = 0x4, scoped, tag = 'scoped memory for tpu_custom_call.1']
    #allocation16 [shape = 'u8[8192]{0}', space=vmem, size = 0x2000, scoped, tag = 'output window, operand 0, single buffered']
    %14 = vsyncpa [#allocation6], 0
    %15 = vsyncpa [#allocation9], 0
    %16 = vsyncpa [#allocation12], 0
    %17 = vsyncpa [#allocation15], 0
    %18 = vsyncpa [#allocation7], 0
    // Predicated region
    $region2: #{tpu_custom_call.1} parent=1 // pred_check
      _
    $region3: #{tpu_custom_call.1} parent=1 // pred_check_branch
      %20 = sbr.rel (0) target = $region5
    $region4: #{tpu_custom_call.1} parent=1 // pred_region
      %s22 = ssub.s32 1024, 1024
      %23 = vsyncadd [#allocation6], %s22
      %s24 = sshll.u32 [#allocation5], 4
      %s25 = int_to_ptr.vmem [resolvable:$true] %s24
      %30 = dma.hbm_to_vmem [thread:$0]  %s0, 1024, %s25, [#allocation6], 64, 64, 4
    $region5: #{tpu_custom_call.1} parent=1 // pred_fallthru
      _
    // Predicated region
    $region6: #{tpu_custom_call.1} parent=1 // pred_check
      _
    $region7: #{tpu_custom_call.1} parent=1 // pred_check_branch
      %32 = sbr.rel (0) target = $region9
    $region8: #{tpu_custom_call.1} parent=1 // pred_region
      %s34 = ssub.s32 2048, 2048
      %35 = vsyncadd [#allocation9], %s34
      %s36 = sshll.u32 [#allocation8], 4
      %s37 = int_to_ptr.vmem [resolvable:$true] %s36
      %42 = dma.hbm_to_vmem [thread:$0]  %s1, 2048, %s37, [#allocation9], 128, 128, 8
    $region9: #{tpu_custom_call.1} parent=1 // pred_fallthru
      _
    // Predicated region
    $region10: #{tpu_custom_call.1} parent=1 // pred_check
      _
    $region11: #{tpu_custom_call.1} parent=1 // pred_check_branch
      %44 = sbr.rel (0) target = $region13
    $region12: #{tpu_custom_call.1} parent=1 // pred_region
      %s46 = ssub.s32 1024, 1024
      %47 = vsyncadd [#allocation9], %s46
      %s48 = sshll.u32 [#allocation10], 4
      %s49 = int_to_ptr.vmem [resolvable:$true] %s48
      %54 = dma.hbm_to_vmem [thread:$0]  %s2, 1024, %s49, [#allocation9], 128, 128, 8
    $region13: #{tpu_custom_call.1} parent=1 // pred_fallthru
      _
    // Predicated region
    $region14: #{tpu_custom_call.1} parent=1 // pred_check
      _
    $region15: #{tpu_custom_call.1} parent=1 // pred_check_branch
      %56 = sbr.rel (0) target = $region17
    $region16: #{tpu_custom_call.1} parent=1 // pred_region
      _
    $region17: #{tpu_custom_call.1} parent=1 // pred_fallthru
      _
    // Predicated region
    $region18: #{tpu_custom_call.1} parent=1 // pred_check
      _
    $region19: #{tpu_custom_call.1} parent=1 // pred_check_branch
      %58 = sbr.rel (0) target = $region21
    $region20: #{tpu_custom_call.1} parent=1 // pred_region
      %s60 = ssub.s32 2048, 2048
      %61 = vsyncadd [#allocation12], %s60
      %s62 = sshll.u32 [#allocation11], 4
      %s63 = int_to_ptr.vmem [resolvable:$true] %s62
      %68 = dma.hbm_to_vmem [thread:$0]  %s4, 2048, %s63, [#allocation12], 128, 128, 8
    $region21: #{tpu_custom_call.1} parent=1 // pred_fallthru
      _
    // Predicated region
    $region22: #{tpu_custom_call.1} parent=1 // pred_check
      _
    $region23: #{tpu_custom_call.1} parent=1 // pred_check_branch
      %70 = sbr.rel (0) target = $region25
    $region24: #{tpu_custom_call.1} parent=1 // pred_region
      _
    $region25: #{tpu_custom_call.1} parent=1 // pred_fallthru
      _
    // Predicated region
    $region26: #{tpu_custom_call.1} parent=1 // pred_check
      _
    $region27: #{tpu_custom_call.1} parent=1 // pred_check_branch
      %72 = sbr.rel (0) target = $region29
    $region28: #{tpu_custom_call.1} parent=1 // pred_region
      %s74 = ssub.s32 512, 512
      %75 = vsyncadd [#allocation12], %s74
      %s76 = sshll.u32 [#allocation13], 4
      %s77 = int_to_ptr.vmem [resolvable:$true] %s76
      %82 = dma.hbm_to_vmem [thread:$0]  %s6, 512, %s77, [#allocation12], 64, 64, 4
    $region29: #{tpu_custom_call.1} parent=1 // pred_fallthru
      _
    // Predicated region
    $region30: #{tpu_custom_call.1} parent=1 // pred_check
      _
    $region31: #{tpu_custom_call.1} parent=1 // pred_check_branch
      %84 = sbr.rel (0) target = $region33
    $region32: #{tpu_custom_call.1} parent=1 // pred_region
      %s86 = ssub.s32 512, 512
      %87 = vsyncadd [#allocation15], %s86
      %s88 = sshll.u32 [#allocation14], 4
      %s89 = int_to_ptr.vmem [resolvable:$true] %s88
      %94 = dma.hbm_to_vmem [thread:$0]  %s7, 512, %s89, [#allocation15], 64, 64, 4
    $region33: #{tpu_custom_call.1} parent=1 // pred_fallthru
      _
    // Predicated region
    $region34: #{tpu_custom_call.1} parent=1 // pred_check
      _
    $region35: #{tpu_custom_call.1} parent=1 // pred_check_branch
      %96 = sbr.rel (0) target = $region37
    $region36: #{tpu_custom_call.1} parent=1 // pred_region
      _
    $region37: #{tpu_custom_call.1} parent=1 // pred_fallthru
      _
    // Predicated region
    $region38: #{tpu_custom_call.1} parent=1 // pred_check
      _
    $region39: #{tpu_custom_call.1} parent=1 // pred_check_branch
      %98 = sbr.rel (0) target = $region41
    $region40: #{tpu_custom_call.1} parent=1 // pred_region
      %99 = dma.done [#allocation6], 1024
    $region41: #{tpu_custom_call.1} parent=1 // pred_fallthru
      _
    // Predicated region
    $region42: #{tpu_custom_call.1} parent=1 // pred_check
      _
    $region43: #{tpu_custom_call.1} parent=1 // pred_check_branch
      %101 = sbr.rel (0) target = $region45
    $region44: #{tpu_custom_call.1} parent=1 // pred_region
      %102 = dma.done [#allocation9], 2048
    $region45: #{tpu_custom_call.1} parent=1 // pred_fallthru
      _
    // Predicated region
    $region46: #{tpu_custom_call.1} parent=1 // pred_check
      _
    $region47: #{tpu_custom_call.1} parent=1 // pred_check_branch
      %104 = sbr.rel (0) target = $region49
    $region48: #{tpu_custom_call.1} parent=1 // pred_region
      %105 = dma.done [#allocation9], 1024
    $region49: #{tpu_custom_call.1} parent=1 // pred_fallthru
      _
    // Predicated region
    $region50: #{tpu_custom_call.1} parent=1 // pred_check
      _
    $region51: #{tpu_custom_call.1} parent=1 // pred_check_branch
      %107 = sbr.rel (0) target = $region53
    $region52: #{tpu_custom_call.1} parent=1 // pred_region
      %108 = dma.done [#allocation12], 2048
    $region53: #{tpu_custom_call.1} parent=1 // pred_fallthru
      _
    // Predicated region
    $region54: #{tpu_custom_call.1} parent=1 // pred_check
      _
    $region55: #{tpu_custom_call.1} parent=1 // pred_check_branch
      %110 = sbr.rel (0) target = $region57
    $region56: #{tpu_custom_call.1} parent=1 // pred_region
      %111 = dma.done [#allocation12], 512
    $region57: #{tpu_custom_call.1} parent=1 // pred_fallthru
      _
    // Predicated region
    $region58: #{tpu_custom_call.1} parent=1 // pred_check
      _
    $region59: #{tpu_custom_call.1} parent=1 // pred_check_branch
      %113 = sbr.rel (0) target = $region61
    $region60: #{tpu_custom_call.1} parent=1 // pred_region
      %114 = dma.done [#allocation15], 512
    $region61: #{tpu_custom_call.1} parent=1 // pred_fallthru
      _
    %v116 = vld [vmem:[#allocation5] sm:$0xf]
    %v117 = vld [vmem:[#allocation5 + $0x4] sm:$0xf]
    %v118 = vld [vmem:[#allocation5 + $0x8] sm:$0xf]
    %v119 = vld [vmem:[#allocation5 + $0xc] sm:$0xf]
    %v120 = vld [vmem:[#allocation5 + $0x10] sm:$0xf]
    %v121 = vld [vmem:[#allocation5 + $0x14] sm:$0xf]
    %v122 = vld [vmem:[#allocation5 + $0x18] sm:$0xf]
    %v123 = vld [vmem:[#allocation5 + $0x1c] sm:$0xf]
    %v124 = vld [vmem:[#allocation5 + $0x20] sm:$0xf]
    %v125 = vld [vmem:[#allocation5 + $0x24] sm:$0xf]
    %v126 = vld [vmem:[#allocation5 + $0x28] sm:$0xf]
    %v127 = vld [vmem:[#allocation5 + $0x2c] sm:$0xf]
    %v128 = vld [vmem:[#allocation5 + $0x30] sm:$0xf]
    %v129 = vld [vmem:[#allocation5 + $0x34] sm:$0xf]
    %v130 = vld [vmem:[#allocation5 + $0x38] sm:$0xf]
    %v131 = vld [vmem:[#allocation5 + $0x3c] sm:$0xf]
    %v132 = vld [vmem:[#allocation8] sm:$0xff]
    %v133 = vld [vmem:[#allocation8 + $0x8] sm:$0xff]
    %v134 = vld [vmem:[#allocation8 + $0x10] sm:$0xff]
    %v135 = vld [vmem:[#allocation8 + $0x18] sm:$0xff]
    %v136 = vld [vmem:[#allocation8 + $0x20] sm:$0xff]
    %v137 = vld [vmem:[#allocation8 + $0x28] sm:$0xff]
    %v138 = vld [vmem:[#allocation8 + $0x30] sm:$0xff]
    %v139 = vld [vmem:[#allocation8 + $0x38] sm:$0xff]
    %v140 = vld [vmem:[#allocation8 + $0x40] sm:$0xff]
    %v141 = vld [vmem:[#allocation8 + $0x48] sm:$0xff]
    %v142 = vld [vmem:[#allocation8 + $0x50] sm:$0xff]
    %v143 = vld [vmem:[#allocation8 + $0x58] sm:$0xff]
    %v144 = vld [vmem:[#allocation8 + $0x60] sm:$0xff]
    %v145 = vld [vmem:[#allocation8 + $0x68] sm:$0xff]
    %v146 = vld [vmem:[#allocation8 + $0x70] sm:$0xff]
    %v147 = vld [vmem:[#allocation8 + $0x78] sm:$0xff]
    %v148 = vld [vmem:[%s3] sm:$0x3]
    %v150 = vlaneseq
    %v151 = vshrl.u32 %v150, 7
    %v152 = vsub.s32 0, %v151
    %v153 = vrot.slane %v148, %v152
    %v154 = vlaneseq
    %v155 = vshrl.u32 %v154, 7
    %v156 = vsub.s32 1, %v155
    %v157 = vrot.slane %v148, %v156
    %v176 = vunpack.c.l.b16 %v116
    %v177 = vunpack.c.l.b16 %v117
    %v178 = vunpack.c.l.b16 %v118
    %v179 = vunpack.c.l.b16 %v119
    %v180 = vunpack.c.l.b16 %v120
    %v181 = vunpack.c.l.b16 %v121
    %v182 = vunpack.c.l.b16 %v122
    %v183 = vunpack.c.l.b16 %v123
    %v184 = vunpack.c.l.b16 %v124
    %v185 = vunpack.c.l.b16 %v125
    %v186 = vunpack.c.l.b16 %v126
    %v187 = vunpack.c.l.b16 %v127
    %v188 = vunpack.c.l.b16 %v128
    %v189 = vunpack.c.l.b16 %v129
    %v190 = vunpack.c.l.b16 %v130
    %v191 = vunpack.c.l.b16 %v131
    %v192 = vpack.c.b16 %v177, %v176
    %v193 = vpack.c.b16 %v179, %v178
    %v194 = vpack.c.b16 %v181, %v180
    %v195 = vpack.c.b16 %v183, %v182
    %v196 = vpack.c.b16 %v185, %v184
    %v197 = vpack.c.b16 %v187, %v186
    %v198 = vpack.c.b16 %v189, %v188
    %v199 = vpack.c.b16 %v191, %v190
    %v224 = vunpack.c.l.b16 %v132
    %v225 = vunpack.c.h.b16 %v132
    %v226 = vunpack.c.l.b16 %v133
    %v227 = vunpack.c.h.b16 %v133
    %v228 = vunpack.c.l.b16 %v134
    %v229 = vunpack.c.h.b16 %v134
    %v230 = vunpack.c.l.b16 %v135
    %v231 = vunpack.c.h.b16 %v135
    %v232 = vunpack.c.l.b16 %v136
    %v233 = vunpack.c.h.b16 %v136
    %v234 = vunpack.c.l.b16 %v137
    %v235 = vunpack.c.h.b16 %v137
    %v236 = vunpack.c.l.b16 %v138
    %v237 = vunpack.c.h.b16 %v138
    %v238 = vunpack.c.l.b16 %v139
    %v239 = vunpack.c.h.b16 %v139
    %v240 = vunpack.c.l.b16 %v140
    %v241 = vunpack.c.h.b16 %v140
    %v242 = vunpack.c.l.b16 %v141
    %v243 = vunpack.c.h.b16 %v141
    %v244 = vunpack.c.l.b16 %v142
    %v245 = vunpack.c.h.b16 %v142
    %v246 = vunpack.c.l.b16 %v143
    %v247 = vunpack.c.h.b16 %v143
    %v248 = vunpack.c.l.b16 %v144
    %v249 = vunpack.c.h.b16 %v144
    %v250 = vunpack.c.l.b16 %v145
    %v251 = vunpack.c.h.b16 %v145
    %v252 = vunpack.c.l.b16 %v146
    %v253 = vunpack.c.h.b16 %v146
    %v254 = vunpack.c.l.b16 %v147
    %v255 = vunpack.c.h.b16 %v147
    %v256 = vpack.c.b16 %v226, %v224
    %v257 = vpack.c.b16 %v227, %v225
    %v258 = vpack.c.b16 %v230, %v228
    %v259 = vpack.c.b16 %v231, %v229
    %v260 = vpack.c.b16 %v234, %v232
    %v261 = vpack.c.b16 %v235, %v233
    %v262 = vpack.c.b16 %v238, %v236
    %v263 = vpack.c.b16 %v239, %v237
    %v264 = vpack.c.b16 %v242, %v240
    %v265 = vpack.c.b16 %v243, %v241
    %v266 = vpack.c.b16 %v246, %v244
    %v267 = vpack.c.b16 %v247, %v245
    %v268 = vpack.c.b16 %v250, %v248
    %v269 = vpack.c.b16 %v251, %v249
    %v270 = vpack.c.b16 %v254, %v252
    %v271 = vpack.c.b16 %v255, %v253
    %288 = vmatprep.subr.bf16.mxu0 %v257
    %289 = vmatpush1.bf16.msra.mxu0 %v256
    %290 = vmatprep.subr.bf16.mxu0 %v259
    %291 = vmatpush1.bf16.msra.mxu0 %v258
    %292 = vmatprep.subr.bf16.mxu0 %v261
    %293 = vmatpush1.bf16.msra.mxu0 %v260
    %294 = vmatprep.subr.bf16.mxu0 %v263
    %295 = vmatpush1.bf16.msra.mxu0 %v262
    %296 = vmatprep.subr.bf16.mxu0 %v265
    %297 = vmatpush1.bf16.msra.mxu0 %v264
    %298 = vmatprep.subr.bf16.mxu0 %v267
    %299 = vmatpush1.bf16.msra.mxu0 %v266
    %300 = vmatprep.subr.bf16.mxu0 %v269
    %301 = vmatpush1.bf16.msra.mxu0 %v268
    %302 = vmatprep.subr.bf16.mxu0 %v271
    %303 = vmatpush1.bf16.msra.mxu0 %v270
    %304 = vmatprep.subr.bf16.mxu0 0
    %305 = vmatpush1.bf16.msra.mxu0 0
    %306 = vmatprep.subr.bf16.mxu0 0
    %307 = vmatpush1.bf16.msra.mxu0 0
    %308 = vmatprep.subr.bf16.mxu0 0
    %309 = vmatpush1.bf16.msra.mxu0 0
    %310 = vmatprep.subr.bf16.mxu0 0
    %311 = vmatpush1.bf16.msra.mxu0 0
    %312 = vmatprep.subr.bf16.mxu0 0
    %313 = vmatpush1.bf16.msra.mxu0 0
    %314 = vmatprep.subr.bf16.mxu0 0
    %315 = vmatpush1.bf16.msra.mxu0 0
    %316 = vmatprep.subr.bf16.mxu0 0
    %317 = vmatpush1.bf16.msra.mxu0 0
    %318 = vmatprep.subr.bf16.mxu0 0
    %319 = vmatpush1.bf16.msra.mxu0 0
    %320 = vmatprep.mubr.bf16.mxu0 0
    %321 = vmatmul.mubr.bf16.gmra.mrb[0].mxu0 %v192
    %v322 = vpop.f32.mrb[0].mxu0
    %v323 = vadd.f32 %v153, %v322
    %v324 = vpop.f32.mrb[0].mxu0
    %v325 = vadd.f32 %v157, %v324
    %v326 = vpop.f32.mrb[0].mxu0
    %v327 = vadd.f32 %v153, %v326
    %v328 = vpop.f32.mrb[0].mxu0
    %v329 = vadd.f32 %v157, %v328
    %330 = vmatprep.mubr.bf16.mxu0 0
    %331 = vmatmul.mubr.bf16.gmra.mrb[0].mxu0 %v193
    %v332 = vpop.f32.mrb[0].mxu0
    %v333 = vadd.f32 %v153, %v332
    %v334 = vpop.f32.mrb[0].mxu0
    %v335 = vadd.f32 %v157, %v334
    %v336 = vpop.f32.mrb[0].mxu0
    %v337 = vadd.f32 %v153, %v336
    %v338 = vpop.f32.mrb[0].mxu0
    %v339 = vadd.f32 %v157, %v338
    %340 = vmatprep.mubr.bf16.mxu0 0
    %341 = vmatmul.mubr.bf16.gmra.mrb[0].mxu0 %v194
    %v342 = vpop.f32.mrb[0].mxu0
    %v343 = vadd.f32 %v153, %v342
    %v344 = vpop.f32.mrb[0].mxu0
    %v345 = vadd.f32 %v157, %v344
    %v346 = vpop.f32.mrb[0].mxu0
    %v347 = vadd.f32 %v153, %v346
    %v348 = vpop.f32.mrb[0].mxu0
    %v349 = vadd.f32 %v157, %v348
    %350 = vmatprep.mubr.bf16.mxu0 0
    %351 = vmatmul.mubr.bf16.gmra.mrb[0].mxu0 %v195
    %v352 = vpop.f32.mrb[0].mxu0
    %v353 = vadd.f32 %v153, %v352
    %v354 = vpop.f32.mrb[0].mxu0
    %v355 = vadd.f32 %v157, %v354
    %v356 = vpop.f32.mrb[0].mxu0
    %v357 = vadd.f32 %v153, %v356
    %v358 = vpop.f32.mrb[0].mxu0
    %v359 = vadd.f32 %v157, %v358
    %360 = vmatprep.mubr.bf16.mxu0 0
    %361 = vmatmul.mubr.bf16.gmra.mrb[0].mxu0 %v196
    %v362 = vpop.f32.mrb[0].mxu0
    %v363 = vadd.f32 %v153, %v362
    %v364 = vpop.f32.mrb[0].mxu0
    %v365 = vadd.f32 %v157, %v364
    %v366 = vpop.f32.mrb[0].mxu0
    %v367 = vadd.f32 %v153, %v366
    %v368 = vpop.f32.mrb[0].mxu0
    %v369 = vadd.f32 %v157, %v368
    %370 = vmatprep.mubr.bf16.mxu0 0
    %371 = vmatmul.mubr.bf16.gmra.mrb[0].mxu0 %v197
    %v372 = vpop.f32.mrb[0].mxu0
    %v373 = vadd.f32 %v153, %v372
    %v374 = vpop.f32.mrb[0].mxu0
    %v375 = vadd.f32 %v157, %v374
    %v376 = vpop.f32.mrb[0].mxu0
    %v377 = vadd.f32 %v153, %v376
    %v378 = vpop.f32.mrb[0].mxu0
    %v379 = vadd.f32 %v157, %v378
    %380 = vmatprep.mubr.bf16.mxu0 0
    %381 = vmatmul.mubr.bf16.gmra.mrb[0].mxu0 %v198
    %v382 = vpop.f32.mrb[0].mxu0
    %v383 = vadd.f32 %v153, %v382
    %v384 = vpop.f32.mrb[0].mxu0
    %v385 = vadd.f32 %v157, %v384
    %v386 = vpop.f32.mrb[0].mxu0
    %v387 = vadd.f32 %v153, %v386
    %v388 = vpop.f32.mrb[0].mxu0
    %v389 = vadd.f32 %v157, %v388
    %390 = vmatprep.mubr.bf16.mxu0 0
    %391 = vmatmul.mubr.bf16.gmra.mrb[0].mxu0 %v199
    %v392 = vpop.f32.mrb[0].mxu0
    %v393 = vadd.f32 %v153, %v392
    %v394 = vpop.f32.mrb[0].mxu0
    %v395 = vadd.f32 %v157, %v394
    %v396 = vpop.f32.mrb[0].mxu0
    %v397 = vadd.f32 %v153, %v396
    %v398 = vpop.f32.mrb[0].mxu0
    %v399 = vadd.f32 %v157, %v398
    %400 = vdwg.mxu0
    %v401 = vpack.c.bf16 %v327, %v323
    %v402 = vpack.c.bf16 %v329, %v325
    %v403 = vpack.c.bf16 %v337, %v333
    %v404 = vpack.c.bf16 %v339, %v335
    %v405 = vpack.c.bf16 %v347, %v343
    %v406 = vpack.c.bf16 %v349, %v345
    %v407 = vpack.c.bf16 %v357, %v353
    %v408 = vpack.c.bf16 %v359, %v355
    %v409 = vpack.c.bf16 %v367, %v363
    %v410 = vpack.c.bf16 %v369, %v365
    %v411 = vpack.c.bf16 %v377, %v373
    %v412 = vpack.c.bf16 %v379, %v375
    %v413 = vpack.c.bf16 %v387, %v383
    %v414 = vpack.c.bf16 %v389, %v385
    %v415 = vpack.c.bf16 %v397, %v393
    %v416 = vpack.c.bf16 %v399, %v395
    %417 = vst [vmem:[#allocation2] sm:$0xff] %v401
    %418 = vst [vmem:[#allocation2 + $0x8] sm:$0xff] %v402
    %419 = vst [vmem:[#allocation2 + $0x10] sm:$0xff] %v403
    %420 = vst [vmem:[#allocation2 + $0x18] sm:$0xff] %v404
    %421 = vst [vmem:[#allocation2 + $0x20] sm:$0xff] %v405
    %422 = vst [vmem:[#allocation2 + $0x28] sm:$0xff] %v406
    %423 = vst [vmem:[#allocation2 + $0x30] sm:$0xff] %v407
    %424 = vst [vmem:[#allocation2 + $0x38] sm:$0xff] %v408
    %425 = vst [vmem:[#allocation2 + $0x40] sm:$0xff] %v409
    %426 = vst [vmem:[#allocation2 + $0x48] sm:$0xff] %v410
    %427 = vst [vmem:[#allocation2 + $0x50] sm:$0xff] %v411
    %428 = vst [vmem:[#allocation2 + $0x58] sm:$0xff] %v412
    %429 = vst [vmem:[#allocation2 + $0x60] sm:$0xff] %v413
    %430 = vst [vmem:[#allocation2 + $0x68] sm:$0xff] %v414
    %431 = vst [vmem:[#allocation2 + $0x70] sm:$0xff] %v415
    %432 = vst [vmem:[#allocation2 + $0x78] sm:$0xff] %v416
    %p433 = scmp.eq.s32.totalorder 0, 0
    // Predicated region
    $region62: #{tpu_custom_call.1} parent=1 // pred_check
      %p434 = pneg %p433
    $region63: #{tpu_custom_call.1} parent=1 // pred_check_branch
      %436 = sbr.rel (%p434) target = $region65
    $region64: #{tpu_custom_call.1} parent=1 // pred_region
      %vm437 = vcmask 523264
      %438 = vst.msk [vmem:[#allocation3] sm:$0xff] %vm437, 0
      %439 = vst.msk [vmem:[#allocation4] sm:$0xff] %vm437, 0.0
      %440 = vst.msk [vmem:[#allocation4 + $0x8] sm:$0xff] %vm437, 0.0
    $region65: #{tpu_custom_call.1} parent=1 // pred_fallthru
      _
    %v441 = vld [vmem:[#allocation3] sm:$0xff]
    %v442 = vld [vmem:[#allocation4] sm:$0xff]
    %v443 = vld [vmem:[#allocation4 + $0x8] sm:$0xff]
    %v444 = vld [vmem:[#allocation2] sm:$0xff]
    %v445 = vld [vmem:[#allocation2 + $0x8] sm:$0xff]
    %v446 = vunpack.c.l.bf16 %v444
    %v447 = vunpack.c.l.bf16 %v445
    %v448 = vunpack.c.h.bf16 %v444
    %v449 = vunpack.c.h.bf16 %v445
    %v450 = vld [vmem:[#allocation10] sm:$0xff]
    %v451 = vld [vmem:[#allocation10 + $0x8] sm:$0xff]
    %v452 = vld [vmem:[#allocation10 + $0x10] sm:$0xff]
    %v453 = vld [vmem:[#allocation10 + $0x18] sm:$0xff]
    %v454 = vld [vmem:[#allocation10 + $0x20] sm:$0xff]
    %v455 = vld [vmem:[#allocation10 + $0x28] sm:$0xff]
    %v456 = vld [vmem:[#allocation10 + $0x30] sm:$0xff]
    %v457 = vld [vmem:[#allocation10 + $0x38] sm:$0xff]
    %v466 = vunpack.c.l.b16 %v450
    %v467 = vunpack.c.h.b16 %v450
    %v468 = vunpack.c.l.b16 %v451
    %v469 = vunpack.c.h.b16 %v451
    %v470 = vunpack.c.l.b16 %v452
    %v471 = vunpack.c.h.b16 %v452
    %v472 = vunpack.c.l.b16 %v453
    %v473 = vunpack.c.h.b16 %v453
    %v474 = vunpack.c.l.b16 %v454
    %v475 = vunpack.c.h.b16 %v454
    %v476 = vunpack.c.l.b16 %v455
    %v477 = vunpack.c.h.b16 %v455
    %v478 = vunpack.c.l.b16 %v456
    %v479 = vunpack.c.h.b16 %v456
    %v480 = vunpack.c.l.b16 %v457
    %v481 = vunpack.c.h.b16 %v457
    %v482 = vpack.c.b16 %v468, %v466
    %v483 = vpack.c.b16 %v469, %v467
    %v484 = vpack.c.b16 %v472, %v470
    %v485 = vpack.c.b16 %v473, %v471
    %v486 = vpack.c.b16 %v476, %v474
    %v487 = vpack.c.b16 %v477, %v475
    %v488 = vpack.c.b16 %v480, %v478
    %v489 = vpack.c.b16 %v481, %v479
    %vm498 = vcmask 523264
    %v500 = vsel %vm498, %v441, 0
    %502 = vmatprep.subr.bf16.mxu0 %v483
    %503 = vmatpush1.bf16.msra.mxu0 %v482
    %504 = vmatprep.subr.bf16.mxu0 %v485
    %505 = vmatpush1.bf16.msra.mxu0 %v484
    %506 = vmatprep.subr.bf16.mxu0 %v487
    %507 = vmatpush1.bf16.msra.mxu0 %v486
    %508 = vmatprep.subr.bf16.mxu0 %v489
    %509 = vmatpush1.bf16.msra.mxu0 %v488
    %510 = vmatprep.subr.bf16.mxu0 0
    %511 = vmatpush1.bf16.msra.mxu0 0
    %512 = vmatprep.subr.bf16.mxu0 0
    %513 = vmatpush1.bf16.msra.mxu0 0
    %514 = vmatprep.subr.bf16.mxu0 0
    %515 = vmatpush1.bf16.msra.mxu0 0
    %516 = vmatprep.subr.bf16.mxu0 0
    %517 = vmatpush1.bf16.msra.mxu0 0
    %518 = vmatprep.subr.bf16.mxu0 0
    %519 = vmatpush1.bf16.msra.mxu0 0
    %520 = vmatprep.subr.bf16.mxu0 0
    %521 = vmatpush1.bf16.msra.mxu0 0
    %522 = vmatprep.subr.bf16.mxu0 0
    %523 = vmatpush1.bf16.msra.mxu0 0
    %524 = vmatprep.subr.bf16.mxu0 0
    %525 = vmatpush1.bf16.msra.mxu0 0
    %526 = vmatprep.subr.bf16.mxu0 0
    %527 = vmatpush1.bf16.msra.mxu0 0
    %528 = vmatprep.subr.bf16.mxu0 0
    %529 = vmatpush1.bf16.msra.mxu0 0
    %530 = vmatprep.subr.bf16.mxu0 0
    %531 = vmatpush1.bf16.msra.mxu0 0
    %532 = vmatprep.subr.bf16.mxu0 0
    %533 = vmatpush1.bf16.msra.mxu0 0
    %534 = vmatprep.mubr.bf16.mxu0 0
    %535 = vmatmul.mubr.bf16.gmra.mrb[0].mxu0 %v500
    %v536 = vpop.f32.mrb[0].mxu0
    %v537 = vadd.f32 0.0, %v536
    %v538 = vpop.f32.mrb[0].mxu0
    %v539 = vadd.f32 0.0, %v538
    %v540 = vpop.f32.mrb[0].mxu0
    %v541 = vadd.f32 0.0, %v540
    %v542 = vpop.f32.mrb[0].mxu0
    %v543 = vadd.f32 0.0, %v542
    %544 = vdwg.mxu0
    %v545 = vadd.f32 %v446, %v537
    %v546 = vadd.f32 %v447, %v539
    %v547 = vadd.f32 %v448, %v541
    %v548 = vadd.f32 %v449, %v543
    %v549 = vxor.u32 %v545, 2147483648
    %v550 = vxor.u32 %v547, 2147483648
    %v551 = vmul.f32 %v549, 1.442695
    %v552 = vpow.pop %v551
    %v553 = vmul.f32 %v550, 1.442695
    %v554 = vpow.pop %v553
    %v555 = vadd.f32 %v552, 1.0
    %v556 = vadd.f32 %v554, 1.0
    %v557 = vrcp.pop %v555
    %v558 = vmul.f32 1.0, %v557
    %v559 = vrcp.pop %v556
    %v560 = vmul.f32 1.0, %v559
    %v561 = vtanh.pop %v546
    %v562 = vtanh.pop %v548
    %v563 = vxor.u32 %v546, 2147483648
    %v564 = vxor.u32 %v548, 2147483648
    %v565 = vmul.f32 %v563, 1.442695
    %v566 = vpow.pop %v565
    %v567 = vmul.f32 %v564, 1.442695
    %v568 = vpow.pop %v567
    %v569 = vadd.f32 %v566, 1.0
    %v570 = vadd.f32 %v568, 1.0
    %v571 = vrcp.pop %v569
    %v572 = vmul.f32 1.0, %v571
    %v573 = vrcp.pop %v570
    %v574 = vmul.f32 1.0, %v573
    %577 = vrot.lane.b32.xlu0 %v442, 64
    %v578 = vpop.permute.xlu0 %577
    %579 = vrot.lane.b32.xlu0 %v443, 64
    %v580 = vpop.permute.xlu0 %579
    %v583 = vmul.f32 %v558, %v578
    %v584 = vmul.f32 %v560, %v580
    %v585 = vmul.f32 %v558, %v561
    %v586 = vmul.f32 %v560, %v562
    %589 = vrot.lane.b32.xlu0 %v585, 64
    %v590 = vpop.permute.xlu0 %589
    %591 = vrot.lane.b32.xlu0 %v586, 64
    %v592 = vpop.permute.xlu0 %591
    %v595 = vadd.f32 %v583, %v590
    %v596 = vadd.f32 %v584, %v592
    %v597 = vtanh.pop %v595
    %v598 = vtanh.pop %v596
    %v599 = vmul.f32 %v572, %v597
    %v600 = vmul.f32 %v574, %v598
    %v601 = vpack.c.bf16 %v600, %v599
    %s602 = scalar_lea.vmem [#allocation2], 16
    %v603 = vld [vmem:[%s602] sm:$0xff]
    %v604 = vld [vmem:[%s602 + $0x8] sm:$0xff]
    %v605 = vunpack.c.l.bf16 %v603
    %v606 = vunpack.c.l.bf16 %v604
    %v607 = vunpack.c.h.bf16 %v603
    %v608 = vunpack.c.h.bf16 %v604
    %610 = vrot.lane.b32.xlu0 %v601, 64
    %v611 = vpop.permute.xlu0 %610
    %v613 = vsel %vm498, %v611, 0
    %615 = vmatprep.subr.bf16.mxu0 %v483
    %616 = vmatpush1.bf16.msra.mxu0 %v482
    %617 = vmatprep.subr.bf16.mxu0 %v485
    %618 = vmatpush1.bf16.msra.mxu0 %v484
    %619 = vmatprep.subr.bf16.mxu0 %v487
    %620 = vmatpush1.bf16.msra.mxu0 %v486
    %621 = vmatprep.subr.bf16.mxu0 %v489
    %622 = vmatpush1.bf16.msra.mxu0 %v488
    %623 = vmatprep.subr.bf16.mxu0 0
    %624 = vmatpush1.bf16.msra.mxu0 0
    %625 = vmatprep.subr.bf16.mxu0 0
    %626 = vmatpush1.bf16.msra.mxu0 0
    %627 = vmatprep.subr.bf16.mxu0 0
    %628 = vmatpush1.bf16.msra.mxu0 0
    %629 = vmatprep.subr.bf16.mxu0 0
    %630 = vmatpush1.bf16.msra.mxu0 0
    %631 = vmatprep.subr.bf16.mxu0 0
    %632 = vmatpush1.bf16.msra.mxu0 0
    %633 = vmatprep.subr.bf16.mxu0 0
    %634 = vmatpush1.bf16.msra.mxu0 0
    %635 = vmatprep.subr.bf16.mxu0 0
    %636 = vmatpush1.bf16.msra.mxu0 0
    %637 = vmatprep.subr.bf16.mxu0 0
    %638 = vmatpush1.bf16.msra.mxu0 0
    %639 = vmatprep.subr.bf16.mxu0 0
    %640 = vmatpush1.bf16.msra.mxu0 0
    %641 = vmatprep.subr.bf16.mxu0 0
    %642 = vmatpush1.bf16.msra.mxu0 0
    %643 = vmatprep.subr.bf16.mxu0 0
    %644 = vmatpush1.bf16.msra.mxu0 0
    %645 = vmatprep.subr.bf16.mxu0 0
    %646 = vmatpush1.bf16.msra.mxu0 0
    %647 = vmatprep.mubr.bf16.mxu0 0
    %648 = vmatmul.mubr.bf16.gmra.mrb[0].mxu0 %v613
    %v649 = vpop.f32.mrb[0].mxu0
    %v650 = vadd.f32 0.0, %v649
    %v651 = vpop.f32.mrb[0].mxu0
    %v652 = vadd.f32 0.0, %v651
    %v653 = vpop.f32.mrb[0].mxu0
    %v654 = vadd.f32 0.0, %v653
    %v655 = vpop.f32.mrb[0].mxu0
    %v656 = vadd.f32 0.0, %v655
    %657 = vdwg.mxu0
    %v658 = vadd.f32 %v605, %v650
    %v659 = vadd.f32 %v606, %v652
    %v660 = vadd.f32 %v607, %v654
    %v661 = vadd.f32 %v608, %v656
    %v662 = vxor.u32 %v658, 2147483648
    %v663 = vxor.u32 %v660, 2147483648
    %v664 = vmul.f32 %v662, 1.442695
    %v665 = vpow.pop %v664
    %v666 = vmul.f32 %v663, 1.442695
    %v667 = vpow.pop %v666
    %v668 = vadd.f32 %v665, 1.0
    %v669 = vadd.f32 %v667, 1.0
    %v670 = vrcp.pop %v668
    %v671 = vmul.f32 1.0, %v670
    %v672 = vrcp.pop %v669
    %v673 = vmul.f32 1.0, %v672
    %v674 = vtanh.pop %v659
    %v675 = vtanh.pop %v661
    %v676 = vxor.u32 %v659, 2147483648
    %v677 = vxor.u32 %v661, 2147483648
    %v678 = vmul.f32 %v676, 1.442695
    %v679 = vpow.pop %v678
    %v680 = vmul.f32 %v677, 1.442695
    %v681 = vpow.pop %v680
    %v682 = vadd.f32 %v679, 1.0
    %v683 = vadd.f32 %v681, 1.0
    %v684 = vrcp.pop %v682
    %v685 = vmul.f32 1.0, %v684
    %v686 = vrcp.pop %v683
    %v687 = vmul.f32 1.0, %v686
    %v688 = vmul.f32 %v671, %v595
    %v689 = vmul.f32 %v673, %v596
    %v690 = vmul.f32 %v671, %v674
    %v691 = vmul.f32 %v673, %v675
    %694 = vrot.lane.b32.xlu0 %v690, 64
    %v695 = vpop.permute.xlu0 %694
    %696 = vrot.lane.b32.xlu0 %v691, 64
    %v697 = vpop.permute.xlu0 %696
    %v700 = vadd.f32 %v688, %v695
    %v701 = vadd.f32 %v689, %v697
    %v702 = vtanh.pop %v700
    %v703 = vtanh.pop %v701
    %v704 = vmul.f32 %v685, %v702
    %v705 = vmul.f32 %v687, %v703
    %v706 = vpack.c.bf16 %v705, %v704
    %s707 = scalar_lea.vmem [#allocation2], 32
    %v708 = vld [vmem:[%s707] sm:$0xff]
    %v709 = vld [vmem:[%s707 + $0x8] sm:$0xff]
    %v710 = vunpack.c.l.bf16 %v708
    %v711 = vunpack.c.l.bf16 %v709
    %v712 = vunpack.c.h.bf16 %v708
    %v713 = vunpack.c.h.bf16 %v709
    %715 = vrot.lane.b32.xlu0 %v706, 64
    %v716 = vpop.permute.xlu0 %715
    %v718 = vsel %vm498, %v716, 0
    %720 = vmatprep.subr.bf16.mxu0 %v483
    %721 = vmatpush1.bf16.msra.mxu0 %v482
    %722 = vmatprep.subr.bf16.mxu0 %v485
    %723 = vmatpush1.bf16.msra.mxu0 %v484
    %724 = vmatprep.subr.bf16.mxu0 %v487
    %725 = vmatpush1.bf16.msra.mxu0 %v486
    %726 = vmatprep.subr.bf16.mxu0 %v489
    %727 = vmatpush1.bf16.msra.mxu0 %v488
    %728 = vmatprep.subr.bf16.mxu0 0
    %729 = vmatpush1.bf16.msra.mxu0 0
    %730 = vmatprep.subr.bf16.mxu0 0
    %731 = vmatpush1.bf16.msra.mxu0 0
    %732 = vmatprep.subr.bf16.mxu0 0
    %733 = vmatpush1.bf16.msra.mxu0 0
    %734 = vmatprep.subr.bf16.mxu0 0
    %735 = vmatpush1.bf16.msra.mxu0 0
    %736 = vmatprep.subr.bf16.mxu0 0
    %737 = vmatpush1.bf16.msra.mxu0 0
    %738 = vmatprep.subr.bf16.mxu0 0
    %739 = vmatpush1.bf16.msra.mxu0 0
    %740 = vmatprep.subr.bf16.mxu0 0
    %741 = vmatpush1.bf16.msra.mxu0 0
    %742 = vmatprep.subr.bf16.mxu0 0
    %743 = vmatpush1.bf16.msra.mxu0 0
    %744 = vmatprep.subr.bf16.mxu0 0
    %745 = vmatpush1.bf16.msra.mxu0 0
    %746 = vmatprep.subr.bf16.mxu0 0
    %747 = vmatpush1.bf16.msra.mxu0 0
    %748 = vmatprep.subr.bf16.mxu0 0
    %749 = vmatpush1.bf16.msra.mxu0 0
    %750 = vmatprep.subr.bf16.mxu0 0
    %751 = vmatpush1.bf16.msra.mxu0 0
    %752 = vmatprep.mubr.bf16.mxu0 0
    %753 = vmatmul.mubr.bf16.gmra.mrb[0].mxu0 %v718
    %v754 = vpop.f32.mrb[0].mxu0
    %v755 = vadd.f32 0.0, %v754
    %v756 = vpop.f32.mrb[0].mxu0
    %v757 = vadd.f32 0.0, %v756
    %v758 = vpop.f32.mrb[0].mxu0
    %v759 = vadd.f32 0.0, %v758
    %v760 = vpop.f32.mrb[0].mxu0
    %v761 = vadd.f32 0.0, %v760
    %762 = vdwg.mxu0
    %v763 = vadd.f32 %v710, %v755
    %v764 = vadd.f32 %v711, %v757
    %v765 = vadd.f32 %v712, %v759
    %v766 = vadd.f32 %v713, %v761
    %v767 = vxor.u32 %v763, 2147483648
    %v768 = vxor.u32 %v765, 2147483648
    %v769 = vmul.f32 %v767, 1.442695
    %v770 = vpow.pop %v769
    %v771 = vmul.f32 %v768, 1.442695
    %v772 = vpow.pop %v771
    %v773 = vadd.f32 %v770, 1.0
    %v774 = vadd.f32 %v772, 1.0
    %v775 = vrcp.pop %v773
    %v776 = vmul.f32 1.0, %v775
    %v777 = vrcp.pop %v774
    %v778 = vmul.f32 1.0, %v777
    %v779 = vtanh.pop %v764
    %v780 = vtanh.pop %v766
    %v781 = vxor.u32 %v764, 2147483648
    %v782 = vxor.u32 %v766, 2147483648
    %v783 = vmul.f32 %v781, 1.442695
    %v784 = vpow.pop %v783
    %v785 = vmul.f32 %v782, 1.442695
    %v786 = vpow.pop %v785
    %v787 = vadd.f32 %v784, 1.0
    %v788 = vadd.f32 %v786, 1.0
    %v789 = vrcp.pop %v787
    %v790 = vmul.f32 1.0, %v789
    %v791 = vrcp.pop %v788
    %v792 = vmul.f32 1.0, %v791
    %v793 = vmul.f32 %v776, %v700
    %v794 = vmul.f32 %v778, %v701
    %v795 = vmul.f32 %v776, %v779
    %v796 = vmul.f32 %v778, %v780
    %799 = vrot.lane.b32.xlu0 %v795, 64
    %v800 = vpop.permute.xlu0 %799
    %801 = vrot.lane.b32.xlu0 %v796, 64
    %v802 = vpop.permute.xlu0 %801
    %v805 = vadd.f32 %v793, %v800
    %v806 = vadd.f32 %v794, %v802
    %v807 = vtanh.pop %v805
    %v808 = vtanh.pop %v806
    %v809 = vmul.f32 %v790, %v807
    %v810 = vmul.f32 %v792, %v808
    %v811 = vpack.c.bf16 %v810, %v809
    %s812 = scalar_lea.vmem [#allocation2], 48
    %v813 = vld [vmem:[%s812] sm:$0xff]
    %v814 = vld [vmem:[%s812 + $0x8] sm:$0xff]
    %v815 = vunpack.c.l.bf16 %v813
    %v816 = vunpack.c.l.bf16 %v814
    %v817 = vunpack.c.h.bf16 %v813
    %v818 = vunpack.c.h.bf16 %v814
    %820 = vrot.lane.b32.xlu0 %v811, 64
    %v821 = vpop.permute.xlu0 %820
    %v823 = vsel %vm498, %v821, 0
    %825 = vmatprep.subr.bf16.mxu0 %v483
    %826 = vmatpush1.bf16.msra.mxu0 %v482
    %827 = vmatprep.subr.bf16.mxu0 %v485
    %828 = vmatpush1.bf16.msra.mxu0 %v484
    %829 = vmatprep.subr.bf16.mxu0 %v487
    %830 = vmatpush1.bf16.msra.mxu0 %v486
    %831 = vmatprep.subr.bf16.mxu0 %v489
    %832 = vmatpush1.bf16.msra.mxu0 %v488
    %833 = vmatprep.subr.bf16.mxu0 0
    %834 = vmatpush1.bf16.msra.mxu0 0
    %835 = vmatprep.subr.bf16.mxu0 0
    %836 = vmatpush1.bf16.msra.mxu0 0
    %837 = vmatprep.subr.bf16.mxu0 0
    %838 = vmatpush1.bf16.msra.mxu0 0
    %839 = vmatprep.subr.bf16.mxu0 0
    %840 = vmatpush1.bf16.msra.mxu0 0
    %841 = vmatprep.subr.bf16.mxu0 0
    %842 = vmatpush1.bf16.msra.mxu0 0
    %843 = vmatprep.subr.bf16.mxu0 0
    %844 = vmatpush1.bf16.msra.mxu0 0
    %845 = vmatprep.subr.bf16.mxu0 0
    %846 = vmatpush1.bf16.msra.mxu0 0
    %847 = vmatprep.subr.bf16.mxu0 0
    %848 = vmatpush1.bf16.msra.mxu0 0
    %849 = vmatprep.subr.bf16.mxu0 0
    %850 = vmatpush1.bf16.msra.mxu0 0
    %851 = vmatprep.subr.bf16.mxu0 0
    %852 = vmatpush1.bf16.msra.mxu0 0
    %853 = vmatprep.subr.bf16.mxu0 0
    %854 = vmatpush1.bf16.msra.mxu0 0
    %855 = vmatprep.subr.bf16.mxu0 0
    %856 = vmatpush1.bf16.msra.mxu0 0
    %857 = vmatprep.mubr.bf16.mxu0 0
    %858 = vmatmul.mubr.bf16.gmra.mrb[0].mxu0 %v823
    %v859 = vpop.f32.mrb[0].mxu0
    %v860 = vadd.f32 0.0, %v859
    %v861 = vpop.f32.mrb[0].mxu0
    %v862 = vadd.f32 0.0, %v861
    %v863 = vpop.f32.mrb[0].mxu0
    %v864 = vadd.f32 0.0, %v863
    %v865 = vpop.f32.mrb[0].mxu0
    %v866 = vadd.f32 0.0, %v865
    %867 = vdwg.mxu0
    %v868 = vadd.f32 %v815, %v860
    %v869 = vadd.f32 %v816, %v862
    %v870 = vadd.f32 %v817, %v864
    %v871 = vadd.f32 %v818, %v866
    %v872 = vxor.u32 %v868, 2147483648
    %v873 = vxor.u32 %v870, 2147483648
    %v874 = vmul.f32 %v872, 1.442695
    %v875 = vpow.pop %v874
    %v876 = vmul.f32 %v873, 1.442695
    %v877 = vpow.pop %v876
    %v878 = vadd.f32 %v875, 1.0
    %v879 = vadd.f32 %v877, 1.0
    %v880 = vrcp.pop %v878
    %v881 = vmul.f32 1.0, %v880
    %v882 = vrcp.pop %v879
    %v883 = vmul.f32 1.0, %v882
    %v884 = vtanh.pop %v869
    %v885 = vtanh.pop %v871
    %v886 = vxor.u32 %v869, 2147483648
    %v887 = vxor.u32 %v871, 2147483648
    %v888 = vmul.f32 %v886, 1.442695
    %v889 = vpow.pop %v888
    %v890 = vmul.f32 %v887, 1.442695
    %v891 = vpow.pop %v890
    %v892 = vadd.f32 %v889, 1.0
    %v893 = vadd.f32 %v891, 1.0
    %v894 = vrcp.pop %v892
    %v895 = vmul.f32 1.0, %v894
    %v896 = vrcp.pop %v893
    %v897 = vmul.f32 1.0, %v896
    %v898 = vmul.f32 %v881, %v805
    %v899 = vmul.f32 %v883, %v806
    %v900 = vmul.f32 %v881, %v884
    %v901 = vmul.f32 %v883, %v885
    %904 = vrot.lane.b32.xlu0 %v900, 64
    %v905 = vpop.permute.xlu0 %904
    %906 = vrot.lane.b32.xlu0 %v901, 64
    %v907 = vpop.permute.xlu0 %906
    %v910 = vadd.f32 %v898, %v905
    %v911 = vadd.f32 %v899, %v907
    %v912 = vtanh.pop %v910
    %v913 = vtanh.pop %v911
    %v914 = vmul.f32 %v895, %v912
    %v915 = vmul.f32 %v897, %v913
    %v916 = vpack.c.bf16 %v915, %v914
    %s917 = scalar_lea.vmem [#allocation2], 64
    %v918 = vld [vmem:[%s917] sm:$0xff]
    %v919 = vld [vmem:[%s917 + $0x8] sm:$0xff]
    %v920 = vunpack.c.l.bf16 %v918
    %v921 = vunpack.c.l.bf16 %v919
    %v922 = vunpack.c.h.bf16 %v918
    %v923 = vunpack.c.h.bf16 %v919
    %925 = vrot.lane.b32.xlu0 %v916, 64
    %v926 = vpop.permute.xlu0 %925
    %v928 = vsel %vm498, %v926, 0
    %930 = vmatprep.subr.bf16.mxu0 %v483
    %931 = vmatpush1.bf16.msra.mxu0 %v482
    %932 = vmatprep.subr.bf16.mxu0 %v485
    %933 = vmatpush1.bf16.msra.mxu0 %v484
    %934 = vmatprep.subr.bf16.mxu0 %v487
    %935 = vmatpush1.bf16.msra.mxu0 %v486
    %936 = vmatprep.subr.bf16.mxu0 %v489
    %937 = vmatpush1.bf16.msra.mxu0 %v488
    %938 = vmatprep.subr.bf16.mxu0 0
    %939 = vmatpush1.bf16.msra.mxu0 0
    %940 = vmatprep.subr.bf16.mxu0 0
    %941 = vmatpush1.bf16.msra.mxu0 0
    %942 = vmatprep.subr.bf16.mxu0 0
    %943 = vmatpush1.bf16.msra.mxu0 0
    %944 = vmatprep.subr.bf16.mxu0 0
    %945 = vmatpush1.bf16.msra.mxu0 0
    %946 = vmatprep.subr.bf16.mxu0 0
    %947 = vmatpush1.bf16.msra.mxu0 0
    %948 = vmatprep.subr.bf16.mxu0 0
    %949 = vmatpush1.bf16.msra.mxu0 0
    %950 = vmatprep.subr.bf16.mxu0 0
    %951 = vmatpush1.bf16.msra.mxu0 0
    %952 = vmatprep.subr.bf16.mxu0 0
    %953 = vmatpush1.bf16.msra.mxu0 0
    %954 = vmatprep.subr.bf16.mxu0 0
    %955 = vmatpush1.bf16.msra.mxu0 0
    %956 = vmatprep.subr.bf16.mxu0 0
    %957 = vmatpush1.bf16.msra.mxu0 0
    %958 = vmatprep.subr.bf16.mxu0 0
    %959 = vmatpush1.bf16.msra.mxu0 0
    %960 = vmatprep.subr.bf16.mxu0 0
    %961 = vmatpush1.bf16.msra.mxu0 0
    %962 = vmatprep.mubr.bf16.mxu0 0
    %963 = vmatmul.mubr.bf16.gmra.mrb[0].mxu0 %v928
    %v964 = vpop.f32.mrb[0].mxu0
    %v965 = vadd.f32 0.0, %v964
    %v966 = vpop.f32.mrb[0].mxu0
    %v967 = vadd.f32 0.0, %v966
    %v968 = vpop.f32.mrb[0].mxu0
    %v969 = vadd.f32 0.0, %v968
    %v970 = vpop.f32.mrb[0].mxu0
    %v971 = vadd.f32 0.0, %v970
    %972 = vdwg.mxu0
    %v973 = vadd.f32 %v920, %v965
    %v974 = vadd.f32 %v921, %v967
    %v975 = vadd.f32 %v922, %v969
    %v976 = vadd.f32 %v923, %v971
    %v977 = vxor.u32 %v973, 2147483648
    %v978 = vxor.u32 %v975, 2147483648
    %v979 = vmul.f32 %v977, 1.442695
    %v980 = vpow.pop %v979
    %v981 = vmul.f32 %v978, 1.442695
    %v982 = vpow.pop %v981
    %v983 = vadd.f32 %v980, 1.0
    %v984 = vadd.f32 %v982, 1.0
    %v985 = vrcp.pop %v983
    %v986 = vmul.f32 1.0, %v985
    %v987 = vrcp.pop %v984
    %v988 = vmul.f32 1.0, %v987
    %v989 = vtanh.pop %v974
    %v990 = vtanh.pop %v976
    %v991 = vxor.u32 %v974, 2147483648
    %v992 = vxor.u32 %v976, 2147483648
    %v993 = vmul.f32 %v991, 1.442695
    %v994 = vpow.pop %v993
    %v995 = vmul.f32 %v992, 1.442695
    %v996 = vpow.pop %v995
    %v997 = vadd.f32 %v994, 1.0
    %v998 = vadd.f32 %v996, 1.0
    %v999 = vrcp.pop %v997
    %v1000 = vmul.f32 1.0, %v999
    %v1001 = vrcp.pop %v998
    %v1002 = vmul.f32 1.0, %v1001
    %v1003 = vmul.f32 %v986, %v910
    %v1004 = vmul.f32 %v988, %v911
    %v1005 = vmul.f32 %v986, %v989
    %v1006 = vmul.f32 %v988, %v990
    %1009 = vrot.lane.b32.xlu0 %v1005, 64
    %v1010 = vpop.permute.xlu0 %1009
    %1011 = vrot.lane.b32.xlu0 %v1006, 64
    %v1012 = vpop.permute.xlu0 %1011
    %v1015 = vadd.f32 %v1003, %v1010
    %v1016 = vadd.f32 %v1004, %v1012
    %v1017 = vtanh.pop %v1015
    %v1018 = vtanh.pop %v1016
    %v1019 = vmul.f32 %v1000, %v1017
    %v1020 = vmul.f32 %v1002, %v1018
    %v1021 = vpack.c.bf16 %v1020, %v1019
    %s1022 = scalar_lea.vmem [#allocation2], 80
    %v1023 = vld [vmem:[%s1022] sm:$0xff]
    %v1024 = vld [vmem:[%s1022 + $0x8] sm:$0xff]
    %v1025 = vunpack.c.l.bf16 %v1023
    %v1026 = vunpack.c.l.bf16 %v1024
    %v1027 = vunpack.c.h.bf16 %v1023
    %v1028 = vunpack.c.h.bf16 %v1024
    %1030 = vrot.lane.b32.xlu0 %v1021, 64
    %v1031 = vpop.permute.xlu0 %1030
    %v1033 = vsel %vm498, %v1031, 0
    %1035 = vmatprep.subr.bf16.mxu0 %v483
    %1036 = vmatpush1.bf16.msra.mxu0 %v482
    %1037 = vmatprep.subr.bf16.mxu0 %v485
    %1038 = vmatpush1.bf16.msra.mxu0 %v484
    %1039 = vmatprep.subr.bf16.mxu0 %v487
    %1040 = vmatpush1.bf16.msra.mxu0 %v486
    %1041 = vmatprep.subr.bf16.mxu0 %v489
    %1042 = vmatpush1.bf16.msra.mxu0 %v488
    %1043 = vmatprep.subr.bf16.mxu0 0
    %1044 = vmatpush1.bf16.msra.mxu0 0
    %1045 = vmatprep.subr.bf16.mxu0 0
    %1046 = vmatpush1.bf16.msra.mxu0 0
    %1047 = vmatprep.subr.bf16.mxu0 0
    %1048 = vmatpush1.bf16.msra.mxu0 0
    %1049 = vmatprep.subr.bf16.mxu0 0
    %1050 = vmatpush1.bf16.msra.mxu0 0
    %1051 = vmatprep.subr.bf16.mxu0 0
    %1052 = vmatpush1.bf16.msra.mxu0 0
    %1053 = vmatprep.subr.bf16.mxu0 0
    %1054 = vmatpush1.bf16.msra.mxu0 0
    %1055 = vmatprep.subr.bf16.mxu0 0
    %1056 = vmatpush1.bf16.msra.mxu0 0
    %1057 = vmatprep.subr.bf16.mxu0 0
    %1058 = vmatpush1.bf16.msra.mxu0 0
    %1059 = vmatprep.subr.bf16.mxu0 0
    %1060 = vmatpush1.bf16.msra.mxu0 0
    %1061 = vmatprep.subr.bf16.mxu0 0
    %1062 = vmatpush1.bf16.msra.mxu0 0
    %1063 = vmatprep.subr.bf16.mxu0 0
    %1064 = vmatpush1.bf16.msra.mxu0 0
    %1065 = vmatprep.subr.bf16.mxu0 0
    %1066 = vmatpush1.bf16.msra.mxu0 0
    %1067 = vmatprep.mubr.bf16.mxu0 0
    %1068 = vmatmul.mubr.bf16.gmra.mrb[0].mxu0 %v1033
    %v1069 = vpop.f32.mrb[0].mxu0
    %v1070 = vadd.f32 0.0, %v1069
    %v1071 = vpop.f32.mrb[0].mxu0
    %v1072 = vadd.f32 0.0, %v1071
    %v1073 = vpop.f32.mrb[0].mxu0
    %v1074 = vadd.f32 0.0, %v1073
    %v1075 = vpop.f32.mrb[0].mxu0
    %v1076 = vadd.f32 0.0, %v1075
    %1077 = vdwg.mxu0
    %v1078 = vadd.f32 %v1025, %v1070
    %v1079 = vadd.f32 %v1026, %v1072
    %v1080 = vadd.f32 %v1027, %v1074
    %v1081 = vadd.f32 %v1028, %v1076
    %v1082 = vxor.u32 %v1078, 2147483648
    %v1083 = vxor.u32 %v1080, 2147483648
    %v1084 = vmul.f32 %v1082, 1.442695
    %v1085 = vpow.pop %v1084
    %v1086 = vmul.f32 %v1083, 1.442695
    %v1087 = vpow.pop %v1086
    %v1088 = vadd.f32 %v1085, 1.0
    %v1089 = vadd.f32 %v1087, 1.0
    %v1090 = vrcp.pop %v1088
    %v1091 = vmul.f32 1.0, %v1090
    %v1092 = vrcp.pop %v1089
    %v1093 = vmul.f32 1.0, %v1092
    %v1094 = vtanh.pop %v1079
    %v1095 = vtanh.pop %v1081
    %v1096 = vxor.u32 %v1079, 2147483648
    %v1097 = vxor.u32 %v1081, 2147483648
    %v1098 = vmul.f32 %v1096, 1.442695
    %v1099 = vpow.pop %v1098
    %v1100 = vmul.f32 %v1097, 1.442695
    %v1101 = vpow.pop %v1100
    %v1102 = vadd.f32 %v1099, 1.0
    %v1103 = vadd.f32 %v1101, 1.0
    %v1104 = vrcp.pop %v1102
    %v1105 = vmul.f32 1.0, %v1104
    %v1106 = vrcp.pop %v1103
    %v1107 = vmul.f32 1.0, %v1106
    %v1108 = vmul.f32 %v1091, %v1015
    %v1109 = vmul.f32 %v1093, %v1016
    %v1110 = vmul.f32 %v1091, %v1094
    %v1111 = vmul.f32 %v1093, %v1095
    %1114 = vrot.lane.b32.xlu0 %v1110, 64
    %v1115 = vpop.permute.xlu0 %1114
    %1116 = vrot.lane.b32.xlu0 %v1111, 64
    %v1117 = vpop.permute.xlu0 %1116
    %v1120 = vadd.f32 %v1108, %v1115
    %v1121 = vadd.f32 %v1109, %v1117
    %v1122 = vtanh.pop %v1120
    %v1123 = vtanh.pop %v1121
    %v1124 = vmul.f32 %v1105, %v1122
    %v1125 = vmul.f32 %v1107, %v1123
    %v1126 = vpack.c.bf16 %v1125, %v1124
    %s1127 = scalar_lea.vmem [#allocation2], 96
    %v1128 = vld [vmem:[%s1127] sm:$0xff]
    %v1129 = vld [vmem:[%s1127 + $0x8] sm:$0xff]
    %v1130 = vunpack.c.l.bf16 %v1128
    %v1131 = vunpack.c.l.bf16 %v1129
    %v1132 = vunpack.c.h.bf16 %v1128
    %v1133 = vunpack.c.h.bf16 %v1129
    %1135 = vrot.lane.b32.xlu0 %v1126, 64
    %v1136 = vpop.permute.xlu0 %1135
    %v1138 = vsel %vm498, %v1136, 0
    %1140 = vmatprep.subr.bf16.mxu0 %v483
    %1141 = vmatpush1.bf16.msra.mxu0 %v482
    %1142 = vmatprep.subr.bf16.mxu0 %v485
    %1143 = vmatpush1.bf16.msra.mxu0 %v484
    %1144 = vmatprep.subr.bf16.mxu0 %v487
    %1145 = vmatpush1.bf16.msra.mxu0 %v486
    %1146 = vmatprep.subr.bf16.mxu0 %v489
    %1147 = vmatpush1.bf16.msra.mxu0 %v488
    %1148 = vmatprep.subr.bf16.mxu0 0
    %1149 = vmatpush1.bf16.msra.mxu0 0
    %1150 = vmatprep.subr.bf16.mxu0 0
    %1151 = vmatpush1.bf16.msra.mxu0 0
    %1152 = vmatprep.subr.bf16.mxu0 0
    %1153 = vmatpush1.bf16.msra.mxu0 0
    %1154 = vmatprep.subr.bf16.mxu0 0
    %1155 = vmatpush1.bf16.msra.mxu0 0
    %1156 = vmatprep.subr.bf16.mxu0 0
    %1157 = vmatpush1.bf16.msra.mxu0 0
    %1158 = vmatprep.subr.bf16.mxu0 0
    %1159 = vmatpush1.bf16.msra.mxu0 0
    %1160 = vmatprep.subr.bf16.mxu0 0
    %1161 = vmatpush1.bf16.msra.mxu0 0
    %1162 = vmatprep.subr.bf16.mxu0 0
    %1163 = vmatpush1.bf16.msra.mxu0 0
    %1164 = vmatprep.subr.bf16.mxu0 0
    %1165 = vmatpush1.bf16.msra.mxu0 0
    %1166 = vmatprep.subr.bf16.mxu0 0
    %1167 = vmatpush1.bf16.msra.mxu0 0
    %1168 = vmatprep.subr.bf16.mxu0 0
    %1169 = vmatpush1.bf16.msra.mxu0 0
    %1170 = vmatprep.subr.bf16.mxu0 0
    %1171 = vmatpush1.bf16.msra.mxu0 0
    %1172 = vmatprep.mubr.bf16.mxu0 0
    %1173 = vmatmul.mubr.bf16.gmra.mrb[0].mxu0 %v1138
    %v1174 = vpop.f32.mrb[0].mxu0
    %v1175 = vadd.f32 0.0, %v1174
    %v1176 = vpop.f32.mrb[0].mxu0
    %v1177 = vadd.f32 0.0, %v1176
    %v1178 = vpop.f32.mrb[0].mxu0
    %v1179 = vadd.f32 0.0, %v1178
    %v1180 = vpop.f32.mrb[0].mxu0
    %v1181 = vadd.f32 0.0, %v1180
    %1182 = vdwg.mxu0
    %v1183 = vadd.f32 %v1130, %v1175
    %v1184 = vadd.f32 %v1131, %v1177
    %v1185 = vadd.f32 %v1132, %v1179
    %v1186 = vadd.f32 %v1133, %v1181
    %v1187 = vxor.u32 %v1183, 2147483648
    %v1188 = vxor.u32 %v1185, 2147483648
    %v1189 = vmul.f32 %v1187, 1.442695
    %v1190 = vpow.pop %v1189
    %v1191 = vmul.f32 %v1188, 1.442695
    %v1192 = vpow.pop %v1191
    %v1193 = vadd.f32 %v1190, 1.0
    %v1194 = vadd.f32 %v1192, 1.0
    %v1195 = vrcp.pop %v1193
    %v1196 = vmul.f32 1.0, %v1195
    %v1197 = vrcp.pop %v1194
    %v1198 = vmul.f32 1.0, %v1197
    %v1199 = vtanh.pop %v1184
    %v1200 = vtanh.pop %v1186
    %v1201 = vxor.u32 %v1184, 2147483648
    %v1202 = vxor.u32 %v1186, 2147483648
    %v1203 = vmul.f32 %v1201, 1.442695
    %v1204 = vpow.pop %v1203
    %v1205 = vmul.f32 %v1202, 1.442695
    %v1206 = vpow.pop %v1205
    %v1207 = vadd.f32 %v1204, 1.0
    %v1208 = vadd.f32 %v1206, 1.0
    %v1209 = vrcp.pop %v1207
    %v1210 = vmul.f32 1.0, %v1209
    %v1211 = vrcp.pop %v1208
    %v1212 = vmul.f32 1.0, %v1211
    %v1213 = vmul.f32 %v1196, %v1120
    %v1214 = vmul.f32 %v1198, %v1121
    %v1215 = vmul.f32 %v1196, %v1199
    %v1216 = vmul.f32 %v1198, %v1200
    %1219 = vrot.lane.b32.xlu0 %v1215, 64
    %v1220 = vpop.permute.xlu0 %1219
    %1221 = vrot.lane.b32.xlu0 %v1216, 64
    %v1222 = vpop.permute.xlu0 %1221
    %v1225 = vadd.f32 %v1213, %v1220
    %v1226 = vadd.f32 %v1214, %v1222
    %v1227 = vtanh.pop %v1225
    %v1228 = vtanh.pop %v1226
    %v1229 = vmul.f32 %v1210, %v1227
    %v1230 = vmul.f32 %v1212, %v1228
    %v1231 = vpack.c.bf16 %v1230, %v1229
    %s1232 = scalar_lea.vmem [#allocation2], 112
    %v1233 = vld [vmem:[%s1232] sm:$0xff]
    %v1234 = vld [vmem:[%s1232 + $0x8] sm:$0xff]
    %v1235 = vunpack.c.l.bf16 %v1233
    %v1236 = vunpack.c.l.bf16 %v1234
    %v1237 = vunpack.c.h.bf16 %v1233
    %v1238 = vunpack.c.h.bf16 %v1234
    %1240 = vrot.lane.b32.xlu0 %v1231, 64
    %v1241 = vpop.permute.xlu0 %1240
    %v1243 = vsel %vm498, %v1241, 0
    %1245 = vmatprep.subr.bf16.mxu0 %v483
    %1246 = vmatpush1.bf16.msra.mxu0 %v482
    %1247 = vmatprep.subr.bf16.mxu0 %v485
    %1248 = vmatpush1.bf16.msra.mxu0 %v484
    %1249 = vmatprep.subr.bf16.mxu0 %v487
    %1250 = vmatpush1.bf16.msra.mxu0 %v486
    %1251 = vmatprep.subr.bf16.mxu0 %v489
    %1252 = vmatpush1.bf16.msra.mxu0 %v488
    %1253 = vmatprep.subr.bf16.mxu0 0
    %1254 = vmatpush1.bf16.msra.mxu0 0
    %1255 = vmatprep.subr.bf16.mxu0 0
    %1256 = vmatpush1.bf16.msra.mxu0 0
    %1257 = vmatprep.subr.bf16.mxu0 0
    %1258 = vmatpush1.bf16.msra.mxu0 0
    %1259 = vmatprep.subr.bf16.mxu0 0
    %1260 = vmatpush1.bf16.msra.mxu0 0
    %1261 = vmatprep.subr.bf16.mxu0 0
    %1262 = vmatpush1.bf16.msra.mxu0 0
    %1263 = vmatprep.subr.bf16.mxu0 0
    %1264 = vmatpush1.bf16.msra.mxu0 0
    %1265 = vmatprep.subr.bf16.mxu0 0
    %1266 = vmatpush1.bf16.msra.mxu0 0
    %1267 = vmatprep.subr.bf16.mxu0 0
    %1268 = vmatpush1.bf16.msra.mxu0 0
    %1269 = vmatprep.subr.bf16.mxu0 0
    %1270 = vmatpush1.bf16.msra.mxu0 0
    %1271 = vmatprep.subr.bf16.mxu0 0
    %1272 = vmatpush1.bf16.msra.mxu0 0
    %1273 = vmatprep.subr.bf16.mxu0 0
    %1274 = vmatpush1.bf16.msra.mxu0 0
    %1275 = vmatprep.subr.bf16.mxu0 0
    %1276 = vmatpush1.bf16.msra.mxu0 0
    %1277 = vmatprep.mubr.bf16.mxu0 0
    %1278 = vmatmul.mubr.bf16.gmra.mrb[0].mxu0 %v1243
    %v1279 = vpop.f32.mrb[0].mxu0
    %v1280 = vadd.f32 0.0, %v1279
    %v1281 = vpop.f32.mrb[0].mxu0
    %v1282 = vadd.f32 0.0, %v1281
    %v1283 = vpop.f32.mrb[0].mxu0
    %v1284 = vadd.f32 0.0, %v1283
    %v1285 = vpop.f32.mrb[0].mxu0
    %v1286 = vadd.f32 0.0, %v1285
    %1287 = vdwg.mxu0
    %v1288 = vadd.f32 %v1235, %v1280
    %v1289 = vadd.f32 %v1236, %v1282
    %v1290 = vadd.f32 %v1237, %v1284
    %v1291 = vadd.f32 %v1238, %v1286
    %v1292 = vxor.u32 %v1288, 2147483648
    %v1293 = vxor.u32 %v1290, 2147483648
    %v1294 = vmul.f32 %v1292, 1.442695
    %v1295 = vpow.pop %v1294
    %v1296 = vmul.f32 %v1293, 1.442695
    %v1297 = vpow.pop %v1296
    %v1298 = vadd.f32 %v1295, 1.0
    %v1299 = vadd.f32 %v1297, 1.0
    %v1300 = vrcp.pop %v1298
    %v1301 = vmul.f32 1.0, %v1300
    %v1302 = vrcp.pop %v1299
    %v1303 = vmul.f32 1.0, %v1302
    %v1304 = vtanh.pop %v1289
    %v1305 = vtanh.pop %v1291
    %v1306 = vxor.u32 %v1289, 2147483648
    %v1307 = vxor.u32 %v1291, 2147483648
    %v1308 = vmul.f32 %v1306, 1.442695
    %v1309 = vpow.pop %v1308
    %v1310 = vmul.f32 %v1307, 1.442695
    %v1311 = vpow.pop %v1310
    %v1312 = vadd.f32 %v1309, 1.0
    %v1313 = vadd.f32 %v1311, 1.0
    %v1314 = vrcp.pop %v1312
    %v1315 = vmul.f32 1.0, %v1314
    %v1316 = vrcp.pop %v1313
    %v1317 = vmul.f32 1.0, %v1316
    %v1318 = vmul.f32 %v1301, %v1225
    %v1319 = vmul.f32 %v1303, %v1226
    %v1320 = vmul.f32 %v1301, %v1304
    %v1321 = vmul.f32 %v1303, %v1305
    %1324 = vrot.lane.b32.xlu0 %v1320, 64
    %v1325 = vpop.permute.xlu0 %1324
    %1326 = vrot.lane.b32.xlu0 %v1321, 64
    %v1327 = vpop.permute.xlu0 %1326
    %v1330 = vadd.f32 %v1318, %v1325
    %v1331 = vadd.f32 %v1319, %v1327
    %v1332 = vtanh.pop %v1330
    %v1333 = vtanh.pop %v1331
    %v1334 = vmul.f32 %v1315, %v1332
    %v1335 = vmul.f32 %v1317, %v1333
    %v1336 = vpack.c.bf16 %v1335, %v1334
    %1338 = vrot.lane.b32.xlu0 %v1336, 64
    %v1339 = vpop.permute.xlu0 %1338
    %1341 = vst.msk [vmem:[#allocation3] sm:$0xff] %vm498, %v1339
    %1344 = vrot.lane.b32.xlu0 %v1330, 64
    %v1345 = vpop.permute.xlu0 %1344
    %1346 = vrot.lane.b32.xlu0 %v1331, 64
    %v1347 = vpop.permute.xlu0 %1346
    %1350 = vst.msk [vmem:[#allocation4] sm:$0xff] %vm498, %v1345
    %1351 = vst.msk [vmem:[#allocation4 + $0x8] sm:$0xff] %vm498, %v1347
    // Predicated region
    $region66: #{tpu_custom_call.1} parent=1 // pred_check
      %p1352 = pneg %p433
    $region67: #{tpu_custom_call.1} parent=1 // pred_check_branch
      %1354 = sbr.rel (%p1352) target = $region69
    $region68: #{tpu_custom_call.1} parent=1 // pred_region
      %s1355 = scalar_lea.vmem [#allocation5], 56
      %v1356 = vld [vmem:[%s1355] sm:$0xf]
      %v1357 = vld [vmem:[%s1355 + $0x4] sm:$0xf]
      %v1358 = vld [vmem:[#allocation11] sm:$0xff]
      %v1359 = vld [vmem:[#allocation11 + $0x8] sm:$0xff]
      %v1360 = vld [vmem:[#allocation11 + $0x10] sm:$0xff]
      %v1361 = vld [vmem:[#allocation11 + $0x18] sm:$0xff]
      %v1362 = vld [vmem:[#allocation11 + $0x20] sm:$0xff]
      %v1363 = vld [vmem:[#allocation11 + $0x28] sm:$0xff]
      %v1364 = vld [vmem:[#allocation11 + $0x30] sm:$0xff]
      %v1365 = vld [vmem:[#allocation11 + $0x38] sm:$0xff]
      %v1366 = vld [vmem:[#allocation11 + $0x40] sm:$0xff]
      %v1367 = vld [vmem:[#allocation11 + $0x48] sm:$0xff]
      %v1368 = vld [vmem:[#allocation11 + $0x50] sm:$0xff]
      %v1369 = vld [vmem:[#allocation11 + $0x58] sm:$0xff]
      %v1370 = vld [vmem:[#allocation11 + $0x60] sm:$0xff]
      %v1371 = vld [vmem:[#allocation11 + $0x68] sm:$0xff]
      %v1372 = vld [vmem:[#allocation11 + $0x70] sm:$0xff]
      %v1373 = vld [vmem:[#allocation11 + $0x78] sm:$0xff]
      %v1374 = vld [vmem:[%s5] sm:$0x3]
      %v1376 = vlaneseq
      %v1377 = vshrl.u32 %v1376, 7
      %v1378 = vsub.s32 0, %v1377
      %v1379 = vrot.slane %v1374, %v1378
      %v1380 = vlaneseq
      %v1381 = vshrl.u32 %v1380, 7
      %v1382 = vsub.s32 1, %v1381
      %v1383 = vrot.slane %v1374, %v1382
      %v1388 = vunpack.c.l.b16 %v1356
      %v1389 = vunpack.c.l.b16 %v1357
      %v1390 = vpack.c.b16 %v1389, %v1388
      %v1408 = vunpack.c.l.b16 %v1358
      %v1409 = vunpack.c.h.b16 %v1358
      %v1410 = vunpack.c.l.b16 %v1359
      %v1411 = vunpack.c.h.b16 %v1359
      %v1412 = vunpack.c.l.b16 %v1360
      %v1413 = vunpack.c.h.b16 %v1360
      %v1414 = vunpack.c.l.b16 %v1361
      %v1415 = vunpack.c.h.b16 %v1361
      %v1416 = vunpack.c.l.b16 %v1362
      %v1417 = vunpack.c.h.b16 %v1362
      %v1418 = vunpack.c.l.b16 %v1363
      %v1419 = vunpack.c.h.b16 %v1363
      %v1420 = vunpack.c.l.b16 %v1364
      %v1421 = vunpack.c.h.b16 %v1364
      %v1422 = vunpack.c.l.b16 %v1365
      %v1423 = vunpack.c.h.b16 %v1365
      %v1424 = vunpack.c.l.b16 %v1366
      %v1425 = vunpack.c.h.b16 %v1366
      %v1426 = vunpack.c.l.b16 %v1367
      %v1427 = vunpack.c.h.b16 %v1367
      %v1428 = vunpack.c.l.b16 %v1368
      %v1429 = vunpack.c.h.b16 %v1368
      %v1430 = vunpack.c.l.b16 %v1369
      %v1431 = vunpack.c.h.b16 %v1369
      %v1432 = vunpack.c.l.b16 %v1370
      %v1433 = vunpack.c.h.b16 %v1370
      %v1434 = vunpack.c.l.b16 %v1371
      %v1435 = vunpack.c.h.b16 %v1371
      %v1436 = vunpack.c.l.b16 %v1372
      %v1437 = vunpack.c.h.b16 %v1372
      %v1438 = vunpack.c.l.b16 %v1373
      %v1439 = vunpack.c.h.b16 %v1373
      %v1440 = vpack.c.b16 %v1410, %v1408
      %v1441 = vpack.c.b16 %v1411, %v1409
      %v1442 = vpack.c.b16 %v1414, %v1412
      %v1443 = vpack.c.b16 %v1415, %v1413
      %v1444 = vpack.c.b16 %v1418, %v1416
      %v1445 = vpack.c.b16 %v1419, %v1417
      %v1446 = vpack.c.b16 %v1422, %v1420
      %v1447 = vpack.c.b16 %v1423, %v1421
      %v1448 = vpack.c.b16 %v1426, %v1424
      %v1449 = vpack.c.b16 %v1427, %v1425
      %v1450 = vpack.c.b16 %v1430, %v1428
      %v1451 = vpack.c.b16 %v1431, %v1429
      %v1452 = vpack.c.b16 %v1434, %v1432
      %v1453 = vpack.c.b16 %v1435, %v1433
      %v1454 = vpack.c.b16 %v1438, %v1436
      %v1455 = vpack.c.b16 %v1439, %v1437
      %1472 = vmatprep.subr.bf16.mxu0 %v1441
      %1473 = vmatpush1.bf16.msra.mxu0 %v1440
      %1474 = vmatprep.subr.bf16.mxu0 %v1443
      %1475 = vmatpush1.bf16.msra.mxu0 %v1442
      %1476 = vmatprep.subr.bf16.mxu0 %v1445
      %1477 = vmatpush1.bf16.msra.mxu0 %v1444
      %1478 = vmatprep.subr.bf16.mxu0 %v1447
      %1479 = vmatpush1.bf16.msra.mxu0 %v1446
      %1480 = vmatprep.subr.bf16.mxu0 %v1449
      %1481 = vmatpush1.bf16.msra.mxu0 %v1448
      %1482 = vmatprep.subr.bf16.mxu0 %v1451
      %1483 = vmatpush1.bf16.msra.mxu0 %v1450
      %1484 = vmatprep.subr.bf16.mxu0 %v1453
      %1485 = vmatpush1.bf16.msra.mxu0 %v1452
      %1486 = vmatprep.subr.bf16.mxu0 %v1455
      %1487 = vmatpush1.bf16.msra.mxu0 %v1454
      %1488 = vmatprep.subr.bf16.mxu0 0
      %1489 = vmatpush1.bf16.msra.mxu0 0
      %1490 = vmatprep.subr.bf16.mxu0 0
      %1491 = vmatpush1.bf16.msra.mxu0 0
      %1492 = vmatprep.subr.bf16.mxu0 0
      %1493 = vmatpush1.bf16.msra.mxu0 0
      %1494 = vmatprep.subr.bf16.mxu0 0
      %1495 = vmatpush1.bf16.msra.mxu0 0
      %1496 = vmatprep.subr.bf16.mxu0 0
      %1497 = vmatpush1.bf16.msra.mxu0 0
      %1498 = vmatprep.subr.bf16.mxu0 0
      %1499 = vmatpush1.bf16.msra.mxu0 0
      %1500 = vmatprep.subr.bf16.mxu0 0
      %1501 = vmatpush1.bf16.msra.mxu0 0
      %1502 = vmatprep.subr.bf16.mxu0 0
      %1503 = vmatpush1.bf16.msra.mxu0 0
      %1504 = vmatprep.mubr.bf16.mxu0 0
      %1505 = vmatmul.mubr.bf16.gmra.mrb[0].mxu0 %v1390
      %v1506 = vpop.f32.mrb[0].mxu0
      %v1507 = vadd.f32 %v1379, %v1506
      %v1508 = vpop.f32.mrb[0].mxu0
      %v1509 = vadd.f32 %v1383, %v1508
      %v1510 = vpop.f32.mrb[0].mxu0
      %v1511 = vadd.f32 %v1379, %v1510
      %v1512 = vpop.f32.mrb[0].mxu0
      %v1513 = vadd.f32 %v1383, %v1512
      %1514 = vdwg.mxu0
      %v1515 = vxor.u32 %v1507, 2147483648
      %v1516 = vxor.u32 %v1511, 2147483648
      %v1517 = vmul.f32 %v1515, 1.442695
      %v1518 = vpow.pop %v1517
      %v1519 = vmul.f32 %v1516, 1.442695
      %v1520 = vpow.pop %v1519
      %v1521 = vadd.f32 %v1518, 1.0
      %v1522 = vadd.f32 %v1520, 1.0
      %v1523 = vrcp.pop %v1521
      %v1524 = vmul.f32 1.0, %v1523
      %v1525 = vrcp.pop %v1522
      %v1526 = vmul.f32 1.0, %v1525
      %v1527 = vtanh.pop %v1509
      %v1528 = vtanh.pop %v1513
      %v1529 = vxor.u32 %v1509, 2147483648
      %v1530 = vxor.u32 %v1513, 2147483648
      %v1531 = vmul.f32 %v1529, 1.442695
      %v1532 = vpow.pop %v1531
      %v1533 = vmul.f32 %v1530, 1.442695
      %v1534 = vpow.pop %v1533
      %v1535 = vadd.f32 %v1532, 1.0
      %v1536 = vadd.f32 %v1534, 1.0
      %v1537 = vrcp.pop %v1535
      %v1538 = vmul.f32 1.0, %v1537
      %v1539 = vrcp.pop %v1536
      %v1540 = vmul.f32 1.0, %v1539
      %v1541 = vmul.f32 %v1524, 0.0
      %v1542 = vmul.f32 %v1526, 0.0
      %v1543 = vmul.f32 %v1524, %v1527
      %v1544 = vmul.f32 %v1526, %v1528
      %1547 = vrot.lane.b32.xlu0 %v1543, 64
      %v1548 = vpop.permute.xlu0 %1547
      %1549 = vrot.lane.b32.xlu0 %v1544, 64
      %v1550 = vpop.permute.xlu0 %1549
      %v1553 = vadd.f32 %v1541, %v1548
      %v1554 = vadd.f32 %v1542, %v1550
      %v1555 = vtanh.pop %v1553
      %v1556 = vtanh.pop %v1554
      %v1557 = vmul.f32 %v1538, %v1555
      %v1558 = vmul.f32 %v1540, %v1556
      %v1559 = vpack.c.bf16 %v1558, %v1557
      %v1560 = vld [vmem:[#allocation13] sm:$0xf]
      %v1561 = vld [vmem:[#allocation13 + $0x4] sm:$0xf]
      %v1562 = vld [vmem:[#allocation13 + $0x8] sm:$0xf]
      %v1563 = vld [vmem:[#allocation13 + $0xc] sm:$0xf]
      %v1564 = vld [vmem:[#allocation13 + $0x10] sm:$0xf]
      %v1565 = vld [vmem:[#allocation13 + $0x14] sm:$0xf]
      %v1566 = vld [vmem:[#allocation13 + $0x18] sm:$0xf]
      %v1567 = vld [vmem:[#allocation13 + $0x1c] sm:$0xf]
      %v1568 = vld [vmem:[#allocation14] sm:$0xf]
      %v1569 = vld [vmem:[#allocation14 + $0x4] sm:$0xf]
      %v1570 = vld [vmem:[#allocation14 + $0x8] sm:$0xf]
      %v1571 = vld [vmem:[#allocation14 + $0xc] sm:$0xf]
      %v1572 = vld [vmem:[#allocation14 + $0x10] sm:$0xf]
      %v1573 = vld [vmem:[#allocation14 + $0x14] sm:$0xf]
      %v1574 = vld [vmem:[#allocation14 + $0x18] sm:$0xf]
      %v1575 = vld [vmem:[#allocation14 + $0x1c] sm:$0xf]
      %1577 = vrot.lane.b32.xlu0 %v1559, 64
      %v1578 = vpop.permute.xlu0 %1577
      %v1587 = vunpack.c.l.b16 %v1568
      %v1588 = vunpack.c.l.b16 %v1569
      %v1589 = vunpack.c.l.b16 %v1570
      %v1590 = vunpack.c.l.b16 %v1571
      %v1591 = vunpack.c.l.b16 %v1572
      %v1592 = vunpack.c.l.b16 %v1573
      %v1593 = vunpack.c.l.b16 %v1574
      %v1594 = vunpack.c.l.b16 %v1575
      %v1595 = vpack.c.b16 %v1588, %v1587
      %v1596 = vpack.c.b16 %v1590, %v1589
      %v1597 = vpack.c.b16 %v1592, %v1591
      %v1598 = vpack.c.b16 %v1594, %v1593
      %v1604 = vsel %vm498, %v1578, 0
      %1606 = vmatprep.subr.bf16.mxu0 0
      %1607 = vmatpush1.bf16.msra.mxu0 %v1595
      %1608 = vmatprep.subr.bf16.mxu0 0
      %1609 = vmatpush1.bf16.msra.mxu0 %v1596
      %1610 = vmatprep.subr.bf16.mxu0 0
      %1611 = vmatpush1.bf16.msra.mxu0 %v1597
      %1612 = vmatprep.subr.bf16.mxu0 0
      %1613 = vmatpush1.bf16.msra.mxu0 %v1598
      %1614 = vmatprep.subr.bf16.mxu0 0
      %1615 = vmatpush1.bf16.msra.mxu0 0
      %1616 = vmatprep.subr.bf16.mxu0 0
      %1617 = vmatpush1.bf16.msra.mxu0 0
      %1618 = vmatprep.subr.bf16.mxu0 0
      %1619 = vmatpush1.bf16.msra.mxu0 0
      %1620 = vmatprep.subr.bf16.mxu0 0
      %1621 = vmatpush1.bf16.msra.mxu0 0
      %1622 = vmatprep.subr.bf16.mxu0 0
      %1623 = vmatpush1.bf16.msra.mxu0 0
      %1624 = vmatprep.subr.bf16.mxu0 0
      %1625 = vmatpush1.bf16.msra.mxu0 0
      %1626 = vmatprep.subr.bf16.mxu0 0
      %1627 = vmatpush1.bf16.msra.mxu0 0
      %1628 = vmatprep.subr.bf16.mxu0 0
      %1629 = vmatpush1.bf16.msra.mxu0 0
      %1630 = vmatprep.subr.bf16.mxu0 0
      %1631 = vmatpush1.bf16.msra.mxu0 0
      %1632 = vmatprep.subr.bf16.mxu0 0
      %1633 = vmatpush1.bf16.msra.mxu0 0
      %1634 = vmatprep.subr.bf16.mxu0 0
      %1635 = vmatpush1.bf16.msra.mxu0 0
      %1636 = vmatprep.subr.bf16.mxu0 0
      %1637 = vmatpush1.bf16.msra.mxu0 0
      %1638 = vmatprep.mubr.bf16.mxu0 0
      %1639 = vmatmul.mubr.bf16.gmra.mrb[0].mxu0 %v1604
      %v1640 = vpop.f32.mrb[0].mxu0
      %v1641 = vadd.f32 0.0, %v1640
      %v1642 = vpop.f32.mrb[0].mxu0
      %v1643 = vpop.f32.mrb[0].mxu0
      %v1644 = vadd.f32 0.0, %v1643
      %v1645 = vpop.f32.mrb[0].mxu0
      %1646 = vdwg.mxu0
      %v1655 = vunpack.c.l.b16 %v1560
      %v1656 = vunpack.c.l.b16 %v1561
      %v1657 = vunpack.c.l.b16 %v1562
      %v1658 = vunpack.c.l.b16 %v1563
      %v1659 = vunpack.c.l.b16 %v1564
      %v1660 = vunpack.c.l.b16 %v1565
      %v1661 = vunpack.c.l.b16 %v1566
      %v1662 = vunpack.c.l.b16 %v1567
      %v1663 = vpack.c.b16 %v1656, %v1655
      %v1664 = vpack.c.b16 %v1658, %v1657
      %v1665 = vpack.c.b16 %v1660, %v1659
      %v1666 = vpack.c.b16 %v1662, %v1661
      %v1672 = vsel %vm498, %v1339, 0
      %1674 = vmatprep.subr.bf16.mxu0 0
      %1675 = vmatpush1.bf16.msra.mxu0 %v1663
      %1676 = vmatprep.subr.bf16.mxu0 0
      %1677 = vmatpush1.bf16.msra.mxu0 %v1664
      %1678 = vmatprep.subr.bf16.mxu0 0
      %1679 = vmatpush1.bf16.msra.mxu0 %v1665
      %1680 = vmatprep.subr.bf16.mxu0 0
      %1681 = vmatpush1.bf16.msra.mxu0 %v1666
      %1682 = vmatprep.subr.bf16.mxu0 0
      %1683 = vmatpush1.bf16.msra.mxu0 0
      %1684 = vmatprep.subr.bf16.mxu0 0
      %1685 = vmatpush1.bf16.msra.mxu0 0
      %1686 = vmatprep.subr.bf16.mxu0 0
      %1687 = vmatpush1.bf16.msra.mxu0 0
      %1688 = vmatprep.subr.bf16.mxu0 0
      %1689 = vmatpush1.bf16.msra.mxu0 0
      %1690 = vmatprep.subr.bf16.mxu0 0
      %1691 = vmatpush1.bf16.msra.mxu0 0
      %1692 = vmatprep.subr.bf16.mxu0 0
      %1693 = vmatpush1.bf16.msra.mxu0 0
      %1694 = vmatprep.subr.bf16.mxu0 0
      %1695 = vmatpush1.bf16.msra.mxu0 0
      %1696 = vmatprep.subr.bf16.mxu0 0
      %1697 = vmatpush1.bf16.msra.mxu0 0
      %1698 = vmatprep.subr.bf16.mxu0 0
      %1699 = vmatpush1.bf16.msra.mxu0 0
      %1700 = vmatprep.subr.bf16.mxu0 0
      %1701 = vmatpush1.bf16.msra.mxu0 0
      %1702 = vmatprep.subr.bf16.mxu0 0
      %1703 = vmatpush1.bf16.msra.mxu0 0
      %1704 = vmatprep.subr.bf16.mxu0 0
      %1705 = vmatpush1.bf16.msra.mxu0 0
      %1706 = vmatprep.mubr.bf16.mxu0 0
      %1707 = vmatmul.mubr.bf16.gmra.mrb[0].mxu0 %v1672
      %v1708 = vpop.f32.mrb[0].mxu0
      %v1709 = vadd.f32 %v1641, %v1708
      %v1710 = vpop.f32.mrb[0].mxu0
      %v1711 = vpop.f32.mrb[0].mxu0
      %v1712 = vadd.f32 %v1644, %v1711
      %v1713 = vpop.f32.mrb[0].mxu0
      %1714 = vdwg.mxu0
      %v1715 = vld [vmem:[%s8] sm:$0x1]
      %v1717 = vlaneseq
      %v1718 = vshrl.u32 %v1717, 7
      %v1719 = vsub.s32 0, %v1718
      %v1720 = vrot.slane %v1715, %v1719
      %v1722 = vadd.f32 %v1709, %v1720
      %v1723 = vadd.f32 %v1712, %v1720
      %v1724 = vmax.f32 %v1722, 0.0
      %v1725 = vmax.f32 %v1723, 0.0
      %1726 = vst [vmem:[#allocation16] sm:$0xff] %v1724
      %1727 = vst [vmem:[#allocation16 + $0x8] sm:$0xff] %v1725
    $region69: #{tpu_custom_call.1} parent=1 // pred_fallthru
      _
    // Predicated region
    $region70: #{tpu_custom_call.1} parent=1 // pred_check
      _
    $region71: #{tpu_custom_call.1} parent=1 // pred_check_branch
      %1729 = sbr.rel (0) target = $region73
    $region72: #{tpu_custom_call.1} parent=1 // pred_region
      %s1731 = ssub.s32 256, 256
      %1732 = vsyncadd [#allocation7], %s1731
      %s1733 = sshll.u32 [#allocation16], 4
      %s1734 = int_to_ptr.vmem [resolvable:$true] %s1733
      %1739 = dma.vmem_to_hbm [thread:$0]  %s1734, 256, %s9, [#allocation7], 128, 128, 8
    $region73: #{tpu_custom_call.1} parent=1 // pred_fallthru
      _
    // Predicated region
    $region74: #{tpu_custom_call.1} parent=1 // pred_check
      _
    $region75: #{tpu_custom_call.1} parent=1 // pred_check_branch
      %1741 = sbr.rel (0) target = $region77
    $region76: #{tpu_custom_call.1} parent=1 // pred_region
      %1742 = dma.done [#allocation7], 256
    $region77: #{tpu_custom_call.1} parent=1 // pred_fallthru
      _
    %1743 = vsyncpa [#allocation6], 1
    %1744 = vsyncpa [#allocation9], 1
    %1745 = vsyncpa [#allocation12], 1
    %1746 = vsyncpa [#allocation15], 1
    %1747 = vsyncpa [#allocation7], 1

</llo_original>
